<compile_context>
chip_gen: v6e
topology: v6e:2x2x1
jax: 0.10.0
libtpu: 0.0.40
codegen_flags: <defaults>
</compile_context>

<pallas_src>
import functools

import jax
import jax.numpy as jnp
from jax import lax
from jax.experimental import pallas as pl
from jax.experimental.pallas import tpu as pltpu

BN_EPS = 1e-5
LANE = 128
VMEM_LIMIT = 32 * 1024 * 1024  # explicit scoped-VMEM budget (safe on v5e/v6e/v7x)


def _round_up(x, m):
    return ((x + m - 1) // m) * m


# ---------------------------------------------------------------------------
# Pass 1: fused im2col + conv matmul + per-tile partial BN statistics
# ---------------------------------------------------------------------------
def _conv_stats_kernel(x0_ref, x1_ref, w_ref, y_ref, stats_ref, *,
                       kh, kw, stride, tile_oh, tile_ih, ow, cin, k, k_pad):
    # x0/x1 : (1, TILE_IH, W_pad, Cin) bf16 — padded-input H slabs t and t+1
    # w     : (K_pad, TILE_CO) bf16 (im2col-ordered weights)
    # y     : (TILE_OH*OW, TILE_CO) bf16 pre-BN activations
    # stats : (1, 2, TILE_CO) f32 per-tile partial [sum ; sum-of-squares]
    rows = []
    for oh in range(tile_oh):                      # build the patch tile in VMEM
        pieces = []
        for i in range(kh):
            r = oh * stride + i                    # row inside the 2-slab window
            if r < tile_ih:
                line = x0_ref[0, r, :, :]          # (W_pad, Cin)
            else:
                line = x1_ref[0, r - tile_ih, :, :]
            for j in range(kw):
                if stride == 1:
                    pieces.append(line[j:j + ow, :])
                else:
                    pieces.append(lax.slice(
                        line, (j, 0), (j + (ow - 1) * stride + 1, cin),
                        (stride, 1)))
        rows.append(jnp.concatenate(pieces, axis=-1))        # (OW, KH*KW*Cin)
    patches = jnp.concatenate(rows, axis=0) if tile_oh > 1 else rows[0]
    if k_pad > k:  # pad contraction dim only to bf16 sublane granularity (16)
        patches = jnp.concatenate(
            [patches, jnp.zeros((tile_oh * ow, k_pad - k), patches.dtype)],
            axis=-1)

    acc = jnp.dot(patches, w_ref[...], preferred_element_type=jnp.float32)
    y_ref[...] = acc.astype(y_ref.dtype)           # bf16 intermediate writeback

    # Partial BN stats from the f32 accumulator (padded rows/channels are 0).
    s = jnp.sum(acc, axis=0, keepdims=True)        # (1, TILE_CO)
    ss = jnp.sum(acc * acc, axis=0, keepdims=True)
    stats_ref[0:1, 0:1, :] = s[None]
    stats_ref[0:1, 1:2, :] = ss[None]


# ---------------------------------------------------------------------------
# Pass 2: streaming normalize + affine + ReLU (pure HBM stream)
# ---------------------------------------------------------------------------
def _bn_relu_kernel(y_ref, scale_ref, shift_ref, o_ref):
    y = y_ref[...].astype(jnp.float32)             # bf16 -> f32 in-register
    o_ref[...] = jnp.maximum(y * scale_ref[...] + shift_ref[...], 0.0)


@functools.partial(jax.jit, static_argnames=("kernel_size", "padding", "stride"))
def conv_bn_relu(x_nchw, weight, bias, gamma, beta, *, kernel_size, padding, stride):
    """Forward pass of ConvBnRelu (PyTorch NCHW in / NCHW out)."""
    del bias  # exact no-op: train-mode BN mean subtraction cancels a constant bias
    n, cin, h, w = x_nchw.shape
    cout = weight.shape[0]
    kh = kw = kernel_size

    oh = (h + 2 * padding - kh) // stride + 1
    ow = (w + 2 * padding - kw) // stride + 1
    k = kh * kw * cin
    k_pad = _round_up(k, 16)                       # bf16 sublane granularity only
    cout_p = _round_up(cout, LANE)
    tile_co = 256 if cout_p % 256 == 0 else LANE   # 256-wide MXU cols (v6e/v7x)
    n_co = cout_p // tile_co

    # ----- pass-1 row tiling: TILE_OH output rows per step, halo via 2 slabs.
    tile_oh = max(1, 256 // max(ow, 1))            # aim ~256 patch rows / step
    tile_oh = max(tile_oh, -(-kh // stride))       # halo must fit in two slabs
    while (tile_oh * ow) % 16 != 0:                # bf16-friendly flat row tiles
        tile_oh += 1
    tile_ih = tile_oh * stride
    t_oh = -(-oh // tile_oh)                       # output-row tiles per image
    oh_p = t_oh * tile_oh
    tile_m = tile_oh * ow
    m = n * oh * ow                                # true element count for BN
    m_pad = n * oh_p * ow

    # ----- padded NHWC bf16 input; extra zero rows so slab index (t+1) is valid.
    h_need = max(h + 2 * padding, (t_oh + 1) * tile_ih)
    h_alloc = _round_up(h_need, tile_ih)
    w_alloc = w + 2 * padding
    x_nhwc = jnp.transpose(x_nchw, (0, 2, 3, 1)).astype(jnp.bfloat16)
    x_pad = jnp.pad(x_nhwc, ((0, 0), (padding, h_alloc - h - padding),
                             (padding, w_alloc - w - padding), (0, 0)))

    # ----- weights: (Cout, Cin, KH, KW) -> (K, Cout), matching the patch order.
    w_mat = jnp.transpose(weight, (2, 3, 1, 0)).reshape(k, cout)
    w_p = jnp.pad(w_mat.astype(jnp.bfloat16), ((0, k_pad - k), (0, cout_p - cout)))

    kern = functools.partial(
        _conv_stats_kernel, kh=kh, kw=kw, stride=stride, tile_oh=tile_oh,
        tile_ih=tile_ih, ow=ow, cin=cin, k=k, k_pad=k_pad)
    conv_cost = pl.CostEstimate(
        flops=2 * m_pad * k_pad * cout_p + 3 * m_pad * cout_p,
        transcendentals=0,
        bytes_accessed=(2 * x_pad.size * 2 + n * t_oh * n_co * w_p.size * 2
                        + m_pad * cout_p * 2 + n * t_oh * 2 * cout_p * 4))
    y_flat, part_stats = pl.pallas_call(
        kern,
        grid=(n, t_oh, n_co),
        in_specs=[
            # Same padded input passed twice: H slabs t and t+1 (the KH-1 halo).
            pl.BlockSpec((1, tile_ih, w_alloc, cin), lambda b, t, c: (b, t, 0, 0)),
            pl.BlockSpec((1, tile_ih, w_alloc, cin), lambda b, t, c: (b, t + 1, 0, 0)),
            pl.BlockSpec((k_pad, tile_co), lambda b, t, c: (0, c)),
        ],
        out_specs=(
            pl.BlockSpec((tile_m, tile_co), lambda b, t, c: (b * t_oh + t, c)),
            pl.BlockSpec((1, 2, tile_co), lambda b, t, c: (b * t_oh + t, 0, c)),
        ),
        out_shape=(
            jax.ShapeDtypeStruct((m_pad, cout_p), jnp.bfloat16),   # bf16 pre-BN
            jax.ShapeDtypeStruct((n * t_oh, 2, cout_p), jnp.float32),
        ),
        compiler_params=pltpu.CompilerParams(
            dimension_semantics=("parallel", "parallel", "arbitrary"),
            vmem_limit_bytes=VMEM_LIMIT),
        cost_estimate=conv_cost,
    )(x_pad, x_pad, w_p)

    # ----- tiny cross-tile reduction + fold BN affine into scale/shift (JAX glue).
    inv_m = 1.0 / float(m)
    mean = jnp.sum(part_stats[:, 0, :], axis=0) * inv_m                 # (Cp,)
    var = jnp.maximum(jnp.sum(part_stats[:, 1, :], axis=0) * inv_m
                      - mean * mean, 0.0)                               # (Cp,)
    gamma_p = jnp.pad(gamma.astype(jnp.float32), (0, cout_p - cout))
    beta_p = jnp.pad(beta.astype(jnp.float32), (0, cout_p - cout))
    scale_v = gamma_p * lax.rsqrt(var + BN_EPS)
    shift_v = beta_p - mean * scale_v
    scale = scale_v.reshape(1, cout_p)
    shift = shift_v.reshape(1, cout_p)

    # ----- pass 2: bigger streaming tiles (~2048 rows), decoupled from pass 1.
    blocks_m1 = n * t_oh
    d = max(1, min(blocks_m1, max(1, 2048 // tile_m)))
    while blocks_m1 % d != 0:
        d -= 1
    tile_m2 = tile_m * d
    bn_cost = pl.CostEstimate(
        flops=3 * m_pad * cout_p, transcendentals=0,
        bytes_accessed=m_pad * cout_p * (2 + 4) + 2 * cout_p * 4)
    out_flat = pl.pallas_call(
        _bn_relu_kernel,
        grid=(m_pad // tile_m2, n_co),
        in_specs=[
            pl.BlockSpec((tile_m2, tile_co), lambda i, c: (i, c)),
            pl.BlockSpec((1, tile_co), lambda i, c: (0, c)),
            pl.BlockSpec((1, tile_co), lambda i, c: (0, c)),
        ],
        out_specs=pl.BlockSpec((tile_m2, tile_co), lambda i, c: (i, c)),
        out_shape=jax.ShapeDtypeStruct((m_pad, cout_p), jnp.float32),
        compiler_params=pltpu.CompilerParams(
            dimension_semantics=("parallel", "arbitrary"),
            vmem_limit_bytes=VMEM_LIMIT),
        cost_estimate=bn_cost,
    )(y_flat, scale, shift)

    # Un-pad, (N*OHp*OW, Cout_p) -> NHWC -> NCHW (wrapper glue; fused by XLA).
    out_nhwc = out_flat.reshape(n, oh_p, ow, cout_p)[:, :oh, :, :cout]
    return jnp.transpose(out_nhwc, (0, 3, 1, 2)).astype(x_nchw.dtype)


def _reference(x_nchw, weight, bias, gamma, beta, *, padding, stride,
               matmul_dtype=jnp.float32):
    """Pure-JAX reference (conv + train-mode BN + ReLU) for validation."""
    y = lax.conv_general_dilated(
        x_nchw.astype(matmul_dtype), weight.astype(matmul_dtype),
        window_strides=(stride, stride),
        padding=[(padding, padding), (padding, padding)],
        dimension_numbers=("NCHW", "OIHW", "NCHW"),
        preferred_element_type=jnp.float32,
    ) + bias[None, :, None, None]
    mean = jnp.mean(y, axis=(0, 2, 3), keepdims=True)
    var = jnp.mean((y - mean) ** 2, axis=(0, 2, 3), keepdims=True)
    y = (y - mean) * lax.rsqrt(var + BN_EPS)
    y = gamma[None, :, None, None] * y + beta[None, :, None, None]
    return jnp.maximum(y, 0.0)


if __name__ == "__main__":
    # Small shapes consistent with the module: N=2, Cin=4, H=W=16, Cout=8, k=3.
    N, CIN, H, W = 2, 4, 16, 16
    COUT, KSIZE, PAD, STRIDE = 8, 3, 1, 1

    key = jax.random.PRNGKey(0)
    kx, kw_, kb = jax.random.split(key, 3)

    x = jax.random.normal(kx, (N, CIN, H, W), dtype=jnp.float32)
    fan_in = CIN * KSIZE * KSIZE
    bound = 1.0 / (fan_in ** 0.5)
    weight = jax.random.uniform(kw_, (COUT, CIN, KSIZE, KSIZE),
                                minval=-bound, maxval=bound, dtype=jnp.float32)
    bias = jax.random.uniform(kb, (COUT,), minval=-bound, maxval=bound,
                              dtype=jnp.float32)
    gamma = jnp.ones((COUT,), jnp.float32)   # BN weight init
    beta = jnp.zeros((COUT,), jnp.float32)   # BN bias init

    out = conv_bn_relu(x, weight, bias, gamma, beta,
                       kernel_size=KSIZE, padding=PAD, stride=STRIDE)
    out = jax.block_until_ready(out)
    assert out.shape == (N, COUT, H, W), out.shape

    # Check vs a reference matching the kernel's intentional bf16 MXU inputs
    # (the bf16 pre-BN intermediate adds ~2^-9 relative rounding on top).
    ref_bf16 = _reference(x, weight, bias, gamma, beta, padding=PAD,
                          stride=STRIDE, matmul_dtype=jnp.bfloat16)
    err_b = float(jnp.max(jnp.abs(out - ref_bf16)))
    assert jnp.allclose(out, ref_bf16, atol=1e-2, rtol=1e-2), err_b

    # Loose check vs the full-f32 module semantics (bf16 quantization tolerance).
    ref_f32 = _reference(x, weight, bias, gamma, beta, padding=PAD,
                         stride=STRIDE, matmul_dtype=jnp.float32)
    err_f = float(jnp.max(jnp.abs(out - ref_f32)))
    assert jnp.allclose(out, ref_f32, atol=5e-2, rtol=5e-2), err_f

    print("KERNEL_OK")
</pallas_src>

<mosaic_0001>
module attributes {stable_mosaic.version = 11 : i64} {
  func.func @_conv_stats_kernel(%arg0: i32, %arg1: i32, %arg2: i32, %arg3: memref<1x16x18x4xbf16, #tpu.memory_space<vmem>>, %arg4: memref<1x16x18x4xbf16, #tpu.memory_space<vmem>>, %arg5: memref<48x128xbf16, #tpu.memory_space<vmem>>, %arg6: memref<256x128xbf16, #tpu.memory_space<vmem>>, %arg7: memref<1x2x128xf32, #tpu.memory_space<vmem>>) attributes {dimension_semantics = [#tpu.dimension_semantics<parallel>, #tpu.dimension_semantics<parallel>, #tpu.dimension_semantics<arbitrary>], iteration_bounds = array<i64: 2, 1, 1>, scalar_prefetch = 0 : i64, scratch_operands = 0 : i64, tpu.core_type = #tpu.core_type<tc>, window_params = [{transform_indices = @transform_0, window_bounds = array<i64: 1, 16, 18, 4>}, {transform_indices = @transform_1, window_bounds = array<i64: 1, 16, 18, 4>}, {transform_indices = @transform_2, window_bounds = array<i64: 48, 128>}, {transform_indices = @transform_3, window_bounds = array<i64: 256, 128>}, {transform_indices = @transform_4, window_bounds = array<i64: 1, 2, 128>}]} {
    %c0 = arith.constant 0 : index
    %c0_0 = arith.constant 0 : index
    %c0_1 = arith.constant 0 : index
    %c0_2 = arith.constant 0 : index
    %0 = vector.load %arg3[%c0, %c0_0, %c0_1, %c0_2] : memref<1x16x18x4xbf16, #tpu.memory_space<vmem>>, vector<1x1x18x4xbf16>
    %1 = vector.shape_cast %0 : vector<1x1x18x4xbf16> to vector<18x4xbf16>
    %2 = vector.extract_strided_slice %1 {offsets = [0, 0], sizes = [16, 4], strides = [1, 1]} : vector<18x4xbf16> to vector<16x4xbf16>
    %3 = vector.extract_strided_slice %1 {offsets = [1, 0], sizes = [16, 4], strides = [1, 1]} : vector<18x4xbf16> to vector<16x4xbf16>
    %4 = vector.extract_strided_slice %1 {offsets = [2, 0], sizes = [16, 4], strides = [1, 1]} : vector<18x4xbf16> to vector<16x4xbf16>
    %c0_3 = arith.constant 0 : index
    %c1 = arith.constant 1 : index
    %c0_4 = arith.constant 0 : index
    %c0_5 = arith.constant 0 : index
    %5 = vector.load %arg3[%c0_3, %c1, %c0_4, %c0_5] : memref<1x16x18x4xbf16, #tpu.memory_space<vmem>>, vector<1x1x18x4xbf16>
    %6 = vector.shape_cast %5 : vector<1x1x18x4xbf16> to vector<18x4xbf16>
    %7 = vector.extract_strided_slice %6 {offsets = [0, 0], sizes = [16, 4], strides = [1, 1]} : vector<18x4xbf16> to vector<16x4xbf16>
    %8 = vector.extract_strided_slice %6 {offsets = [1, 0], sizes = [16, 4], strides = [1, 1]} : vector<18x4xbf16> to vector<16x4xbf16>
    %9 = vector.extract_strided_slice %6 {offsets = [2, 0], sizes = [16, 4], strides = [1, 1]} : vector<18x4xbf16> to vector<16x4xbf16>
    %c0_6 = arith.constant 0 : index
    %c2 = arith.constant 2 : index
    %c0_7 = arith.constant 0 : index
    %c0_8 = arith.constant 0 : index
    %10 = vector.load %arg3[%c0_6, %c2, %c0_7, %c0_8] : memref<1x16x18x4xbf16, #tpu.memory_space<vmem>>, vector<1x1x18x4xbf16>
    %11 = vector.shape_cast %10 : vector<1x1x18x4xbf16> to vector<18x4xbf16>
    %12 = vector.extract_strided_slice %11 {offsets = [0, 0], sizes = [16, 4], strides = [1, 1]} : vector<18x4xbf16> to vector<16x4xbf16>
    %13 = vector.extract_strided_slice %11 {offsets = [1, 0], sizes = [16, 4], strides = [1, 1]} : vector<18x4xbf16> to vector<16x4xbf16>
    %14 = vector.extract_strided_slice %11 {offsets = [2, 0], sizes = [16, 4], strides = [1, 1]} : vector<18x4xbf16> to vector<16x4xbf16>
    %15 = tpu.concatenate %2, %3, %4, %7, %8, %9, %12, %13, %14 in 1 : vector<16x4xbf16>, vector<16x4xbf16>, vector<16x4xbf16>, vector<16x4xbf16>, vector<16x4xbf16>, vector<16x4xbf16>, vector<16x4xbf16>, vector<16x4xbf16>, vector<16x4xbf16> -> vector<16x36xbf16>
    %c0_9 = arith.constant 0 : index
    %c1_10 = arith.constant 1 : index
    %c0_11 = arith.constant 0 : index
    %c0_12 = arith.constant 0 : index
    %16 = vector.load %arg3[%c0_9, %c1_10, %c0_11, %c0_12] : memref<1x16x18x4xbf16, #tpu.memory_space<vmem>>, vector<1x1x18x4xbf16>
    %17 = vector.shape_cast %16 : vector<1x1x18x4xbf16> to vector<18x4xbf16>
    %18 = vector.extract_strided_slice %17 {offsets = [0, 0], sizes = [16, 4], strides = [1, 1]} : vector<18x4xbf16> to vector<16x4xbf16>
    %19 = vector.extract_strided_slice %17 {offsets = [1, 0], sizes = [16, 4], strides = [1, 1]} : vector<18x4xbf16> to vector<16x4xbf16>
    %20 = vector.extract_strided_slice %17 {offsets = [2, 0], sizes = [16, 4], strides = [1, 1]} : vector<18x4xbf16> to vector<16x4xbf16>
    %c0_13 = arith.constant 0 : index
    %c2_14 = arith.constant 2 : index
    %c0_15 = arith.constant 0 : index
    %c0_16 = arith.constant 0 : index
    %21 = vector.load %arg3[%c0_13, %c2_14, %c0_15, %c0_16] : memref<1x16x18x4xbf16, #tpu.memory_space<vmem>>, vector<1x1x18x4xbf16>
    %22 = vector.shape_cast %21 : vector<1x1x18x4xbf16> to vector<18x4xbf16>
    %23 = vector.extract_strided_slice %22 {offsets = [0, 0], sizes = [16, 4], strides = [1, 1]} : vector<18x4xbf16> to vector<16x4xbf16>
    %24 = vector.extract_strided_slice %22 {offsets = [1, 0], sizes = [16, 4], strides = [1, 1]} : vector<18x4xbf16> to vector<16x4xbf16>
    %25 = vector.extract_strided_slice %22 {offsets = [2, 0], sizes = [16, 4], strides = [1, 1]} : vector<18x4xbf16> to vector<16x4xbf16>
    %c0_17 = arith.constant 0 : index
    %c3 = arith.constant 3 : index
    %c0_18 = arith.constant 0 : index
    %c0_19 = arith.constant 0 : index
    %26 = vector.load %arg3[%c0_17, %c3, %c0_18, %c0_19] : memref<1x16x18x4xbf16, #tpu.memory_space<vmem>>, vector<1x1x18x4xbf16>
    %27 = vector.shape_cast %26 : vector<1x1x18x4xbf16> to vector<18x4xbf16>
    %28 = vector.extract_strided_slice %27 {offsets = [0, 0], sizes = [16, 4], strides = [1, 1]} : vector<18x4xbf16> to vector<16x4xbf16>
    %29 = vector.extract_strided_slice %27 {offsets = [1, 0], sizes = [16, 4], strides = [1, 1]} : vector<18x4xbf16> to vector<16x4xbf16>
    %30 = vector.extract_strided_slice %27 {offsets = [2, 0], sizes = [16, 4], strides = [1, 1]} : vector<18x4xbf16> to vector<16x4xbf16>
    %31 = tpu.concatenate %18, %19, %20, %23, %24, %25, %28, %29, %30 in 1 : vector<16x4xbf16>, vector<16x4xbf16>, vector<16x4xbf16>, vector<16x4xbf16>, vector<16x4xbf16>, vector<16x4xbf16>, vector<16x4xbf16>, vector<16x4xbf16>, vector<16x4xbf16> -> vector<16x36xbf16>
    %c0_20 = arith.constant 0 : index
    %c2_21 = arith.constant 2 : index
    %c0_22 = arith.constant 0 : index
    %c0_23 = arith.constant 0 : index
    %32 = vector.load %arg3[%c0_20, %c2_21, %c0_22, %c0_23] : memref<1x16x18x4xbf16, #tpu.memory_space<vmem>>, vector<1x1x18x4xbf16>
    %33 = vector.shape_cast %32 : vector<1x1x18x4xbf16> to vector<18x4xbf16>
    %34 = vector.extract_strided_slice %33 {offsets = [0, 0], sizes = [16, 4], strides = [1, 1]} : vector<18x4xbf16> to vector<16x4xbf16>
    %35 = vector.extract_strided_slice %33 {offsets = [1, 0], sizes = [16, 4], strides = [1, 1]} : vector<18x4xbf16> to vector<16x4xbf16>
    %36 = vector.extract_strided_slice %33 {offsets = [2, 0], sizes = [16, 4], strides = [1, 1]} : vector<18x4xbf16> to vector<16x4xbf16>
    %c0_24 = arith.constant 0 : index
    %c3_25 = arith.constant 3 : index
    %c0_26 = arith.constant 0 : index
    %c0_27 = arith.constant 0 : index
    %37 = vector.load %arg3[%c0_24, %c3_25, %c0_26, %c0_27] : memref<1x16x18x4xbf16, #tpu.memory_space<vmem>>, vector<1x1x18x4xbf16>
    %38 = vector.shape_cast %37 : vector<1x1x18x4xbf16> to vector<18x4xbf16>
    %39 = vector.extract_strided_slice %38 {offsets = [0, 0], sizes = [16, 4], strides = [1, 1]} : vector<18x4xbf16> to vector<16x4xbf16>
    %40 = vector.extract_strided_slice %38 {offsets = [1, 0], sizes = [16, 4], strides = [1, 1]} : vector<18x4xbf16> to vector<16x4xbf16>
    %41 = vector.extract_strided_slice %38 {offsets = [2, 0], sizes = [16, 4], strides = [1, 1]} : vector<18x4xbf16> to vector<16x4xbf16>
    %c0_28 = arith.constant 0 : index
    %c4 = arith.constant 4 : index
    %c0_29 = arith.constant 0 : index
    %c0_30 = arith.constant 0 : index
    %42 = vector.load %arg3[%c0_28, %c4, %c0_29, %c0_30] : memref<1x16x18x4xbf16, #tpu.memory_space<vmem>>, vector<1x1x18x4xbf16>
    %43 = vector.shape_cast %42 : vector<1x1x18x4xbf16> to vector<18x4xbf16>
    %44 = vector.extract_strided_slice %43 {offsets = [0, 0], sizes = [16, 4], strides = [1, 1]} : vector<18x4xbf16> to vector<16x4xbf16>
    %45 = vector.extract_strided_slice %43 {offsets = [1, 0], sizes = [16, 4], strides = [1, 1]} : vector<18x4xbf16> to vector<16x4xbf16>
    %46 = vector.extract_strided_slice %43 {offsets = [2, 0], sizes = [16, 4], strides = [1, 1]} : vector<18x4xbf16> to vector<16x4xbf16>
    %47 = tpu.concatenate %34, %35, %36, %39, %40, %41, %44, %45, %46 in 1 : vector<16x4xbf16>, vector<16x4xbf16>, vector<16x4xbf16>, vector<16x4xbf16>, vector<16x4xbf16>, vector<16x4xbf16>, vector<16x4xbf16>, vector<16x4xbf16>, vector<16x4xbf16> -> vector<16x36xbf16>
    %c0_31 = arith.constant 0 : index
    %c3_32 = arith.constant 3 : index
    %c0_33 = arith.constant 0 : index
    %c0_34 = arith.constant 0 : index
    %48 = vector.load %arg3[%c0_31, %c3_32, %c0_33, %c0_34] : memref<1x16x18x4xbf16, #tpu.memory_space<vmem>>, vector<1x1x18x4xbf16>
    %49 = vector.shape_cast %48 : vector<1x1x18x4xbf16> to vector<18x4xbf16>
    %50 = vector.extract_strided_slice %49 {offsets = [0, 0], sizes = [16, 4], strides = [1, 1]} : vector<18x4xbf16> to vector<16x4xbf16>
    %51 = vector.extract_strided_slice %49 {offsets = [1, 0], sizes = [16, 4], strides = [1, 1]} : vector<18x4xbf16> to vector<16x4xbf16>
    %52 = vector.extract_strided_slice %49 {offsets = [2, 0], sizes = [16, 4], strides = [1, 1]} : vector<18x4xbf16> to vector<16x4xbf16>
    %c0_35 = arith.constant 0 : index
    %c4_36 = arith.constant 4 : index
    %c0_37 = arith.constant 0 : index
    %c0_38 = arith.constant 0 : index
    %53 = vector.load %arg3[%c0_35, %c4_36, %c0_37, %c0_38] : memref<1x16x18x4xbf16, #tpu.memory_space<vmem>>, vector<1x1x18x4xbf16>
    %54 = vector.shape_cast %53 : vector<1x1x18x4xbf16> to vector<18x4xbf16>
    %55 = vector.extract_strided_slice %54 {offsets = [0, 0], sizes = [16, 4], strides = [1, 1]} : vector<18x4xbf16> to vector<16x4xbf16>
    %56 = vector.extract_strided_slice %54 {offsets = [1, 0], sizes = [16, 4], strides = [1, 1]} : vector<18x4xbf16> to vector<16x4xbf16>
    %57 = vector.extract_strided_slice %54 {offsets = [2, 0], sizes = [16, 4], strides = [1, 1]} : vector<18x4xbf16> to vector<16x4xbf16>
    %c0_39 = arith.constant 0 : index
    %c5 = arith.constant 5 : index
    %c0_40 = arith.constant 0 : index
    %c0_41 = arith.constant 0 : index
    %58 = vector.load %arg3[%c0_39, %c5, %c0_40, %c0_41] : memref<1x16x18x4xbf16, #tpu.memory_space<vmem>>, vector<1x1x18x4xbf16>
    %59 = vector.shape_cast %58 : vector<1x1x18x4xbf16> to vector<18x4xbf16>
    %60 = vector.extract_strided_slice %59 {offsets = [0, 0], sizes = [16, 4], strides = [1, 1]} : vector<18x4xbf16> to vector<16x4xbf16>
    %61 = vector.extract_strided_slice %59 {offsets = [1, 0], sizes = [16, 4], strides = [1, 1]} : vector<18x4xbf16> to vector<16x4xbf16>
    %62 = vector.extract_strided_slice %59 {offsets = [2, 0], sizes = [16, 4], strides = [1, 1]} : vector<18x4xbf16> to vector<16x4xbf16>
    %63 = tpu.concatenate %50, %51, %52, %55, %56, %57, %60, %61, %62 in 1 : vector<16x4xbf16>, vector<16x4xbf16>, vector<16x4xbf16>, vector<16x4xbf16>, vector<16x4xbf16>, vector<16x4xbf16>, vector<16x4xbf16>, vector<16x4xbf16>, vector<16x4xbf16> -> vector<16x36xbf16>
    %c0_42 = arith.constant 0 : index
    %c4_43 = arith.constant 4 : index
    %c0_44 = arith.constant 0 : index
    %c0_45 = arith.constant 0 : index
    %64 = vector.load %arg3[%c0_42, %c4_43, %c0_44, %c0_45] : memref<1x16x18x4xbf16, #tpu.memory_space<vmem>>, vector<1x1x18x4xbf16>
    %65 = vector.shape_cast %64 : vector<1x1x18x4xbf16> to vector<18x4xbf16>
    %66 = vector.extract_strided_slice %65 {offsets = [0, 0], sizes = [16, 4], strides = [1, 1]} : vector<18x4xbf16> to vector<16x4xbf16>
    %67 = vector.extract_strided_slice %65 {offsets = [1, 0], sizes = [16, 4], strides = [1, 1]} : vector<18x4xbf16> to vector<16x4xbf16>
    %68 = vector.extract_strided_slice %65 {offsets = [2, 0], sizes = [16, 4], strides = [1, 1]} : vector<18x4xbf16> to vector<16x4xbf16>
    %c0_46 = arith.constant 0 : index
    %c5_47 = arith.constant 5 : index
    %c0_48 = arith.constant 0 : index
    %c0_49 = arith.constant 0 : index
    %69 = vector.load %arg3[%c0_46, %c5_47, %c0_48, %c0_49] : memref<1x16x18x4xbf16, #tpu.memory_space<vmem>>, vector<1x1x18x4xbf16>
    %70 = vector.shape_cast %69 : vector<1x1x18x4xbf16> to vector<18x4xbf16>
    %71 = vector.extract_strided_slice %70 {offsets = [0, 0], sizes = [16, 4], strides = [1, 1]} : vector<18x4xbf16> to vector<16x4xbf16>
    %72 = vector.extract_strided_slice %70 {offsets = [1, 0], sizes = [16, 4], strides = [1, 1]} : vector<18x4xbf16> to vector<16x4xbf16>
    %73 = vector.extract_strided_slice %70 {offsets = [2, 0], sizes = [16, 4], strides = [1, 1]} : vector<18x4xbf16> to vector<16x4xbf16>
    %c0_50 = arith.constant 0 : index
    %c6 = arith.constant 6 : index
    %c0_51 = arith.constant 0 : index
    %c0_52 = arith.constant 0 : index
    %74 = vector.load %arg3[%c0_50, %c6, %c0_51, %c0_52] : memref<1x16x18x4xbf16, #tpu.memory_space<vmem>>, vector<1x1x18x4xbf16>
    %75 = vector.shape_cast %74 : vector<1x1x18x4xbf16> to vector<18x4xbf16>
    %76 = vector.extract_strided_slice %75 {offsets = [0, 0], sizes = [16, 4], strides = [1, 1]} : vector<18x4xbf16> to vector<16x4xbf16>
    %77 = vector.extract_strided_slice %75 {offsets = [1, 0], sizes = [16, 4], strides = [1, 1]} : vector<18x4xbf16> to vector<16x4xbf16>
    %78 = vector.extract_strided_slice %75 {offsets = [2, 0], sizes = [16, 4], strides = [1, 1]} : vector<18x4xbf16> to vector<16x4xbf16>
    %79 = tpu.concatenate %66, %67, %68, %71, %72, %73, %76, %77, %78 in 1 : vector<16x4xbf16>, vector<16x4xbf16>, vector<16x4xbf16>, vector<16x4xbf16>, vector<16x4xbf16>, vector<16x4xbf16>, vector<16x4xbf16>, vector<16x4xbf16>, vector<16x4xbf16> -> vector<16x36xbf16>
    %c0_53 = arith.constant 0 : index
    %c5_54 = arith.constant 5 : index
    %c0_55 = arith.constant 0 : index
    %c0_56 = arith.constant 0 : index
    %80 = vector.load %arg3[%c0_53, %c5_54, %c0_55, %c0_56] : memref<1x16x18x4xbf16, #tpu.memory_space<vmem>>, vector<1x1x18x4xbf16>
    %81 = vector.shape_cast %80 : vector<1x1x18x4xbf16> to vector<18x4xbf16>
    %82 = vector.extract_strided_slice %81 {offsets = [0, 0], sizes = [16, 4], strides = [1, 1]} : vector<18x4xbf16> to vector<16x4xbf16>
    %83 = vector.extract_strided_slice %81 {offsets = [1, 0], sizes = [16, 4], strides = [1, 1]} : vector<18x4xbf16> to vector<16x4xbf16>
    %84 = vector.extract_strided_slice %81 {offsets = [2, 0], sizes = [16, 4], strides = [1, 1]} : vector<18x4xbf16> to vector<16x4xbf16>
    %c0_57 = arith.constant 0 : index
    %c6_58 = arith.constant 6 : index
    %c0_59 = arith.constant 0 : index
    %c0_60 = arith.constant 0 : index
    %85 = vector.load %arg3[%c0_57, %c6_58, %c0_59, %c0_60] : memref<1x16x18x4xbf16, #tpu.memory_space<vmem>>, vector<1x1x18x4xbf16>
    %86 = vector.shape_cast %85 : vector<1x1x18x4xbf16> to vector<18x4xbf16>
    %87 = vector.extract_strided_slice %86 {offsets = [0, 0], sizes = [16, 4], strides = [1, 1]} : vector<18x4xbf16> to vector<16x4xbf16>
    %88 = vector.extract_strided_slice %86 {offsets = [1, 0], sizes = [16, 4], strides = [1, 1]} : vector<18x4xbf16> to vector<16x4xbf16>
    %89 = vector.extract_strided_slice %86 {offsets = [2, 0], sizes = [16, 4], strides = [1, 1]} : vector<18x4xbf16> to vector<16x4xbf16>
    %c0_61 = arith.constant 0 : index
    %c7 = arith.constant 7 : index
    %c0_62 = arith.constant 0 : index
    %c0_63 = arith.constant 0 : index
    %90 = vector.load %arg3[%c0_61, %c7, %c0_62, %c0_63] : memref<1x16x18x4xbf16, #tpu.memory_space<vmem>>, vector<1x1x18x4xbf16>
    %91 = vector.shape_cast %90 : vector<1x1x18x4xbf16> to vector<18x4xbf16>
    %92 = vector.extract_strided_slice %91 {offsets = [0, 0], sizes = [16, 4], strides = [1, 1]} : vector<18x4xbf16> to vector<16x4xbf16>
    %93 = vector.extract_strided_slice %91 {offsets = [1, 0], sizes = [16, 4], strides = [1, 1]} : vector<18x4xbf16> to vector<16x4xbf16>
    %94 = vector.extract_strided_slice %91 {offsets = [2, 0], sizes = [16, 4], strides = [1, 1]} : vector<18x4xbf16> to vector<16x4xbf16>
    %95 = tpu.concatenate %82, %83, %84, %87, %88, %89, %92, %93, %94 in 1 : vector<16x4xbf16>, vector<16x4xbf16>, vector<16x4xbf16>, vector<16x4xbf16>, vector<16x4xbf16>, vector<16x4xbf16>, vector<16x4xbf16>, vector<16x4xbf16>, vector<16x4xbf16> -> vector<16x36xbf16>
    %c0_64 = arith.constant 0 : index
    %c6_65 = arith.constant 6 : index
    %c0_66 = arith.constant 0 : index
    %c0_67 = arith.constant 0 : index
    %96 = vector.load %arg3[%c0_64, %c6_65, %c0_66, %c0_67] : memref<1x16x18x4xbf16, #tpu.memory_space<vmem>>, vector<1x1x18x4xbf16>
    %97 = vector.shape_cast %96 : vector<1x1x18x4xbf16> to vector<18x4xbf16>
    %98 = vector.extract_strided_slice %97 {offsets = [0, 0], sizes = [16, 4], strides = [1, 1]} : vector<18x4xbf16> to vector<16x4xbf16>
    %99 = vector.extract_strided_slice %97 {offsets = [1, 0], sizes = [16, 4], strides = [1, 1]} : vector<18x4xbf16> to vector<16x4xbf16>
    %100 = vector.extract_strided_slice %97 {offsets = [2, 0], sizes = [16, 4], strides = [1, 1]} : vector<18x4xbf16> to vector<16x4xbf16>
    %c0_68 = arith.constant 0 : index
    %c7_69 = arith.constant 7 : index
    %c0_70 = arith.constant 0 : index
    %c0_71 = arith.constant 0 : index
    %101 = vector.load %arg3[%c0_68, %c7_69, %c0_70, %c0_71] : memref<1x16x18x4xbf16, #tpu.memory_space<vmem>>, vector<1x1x18x4xbf16>
    %102 = vector.shape_cast %101 : vector<1x1x18x4xbf16> to vector<18x4xbf16>
    %103 = vector.extract_strided_slice %102 {offsets = [0, 0], sizes = [16, 4], strides = [1, 1]} : vector<18x4xbf16> to vector<16x4xbf16>
    %104 = vector.extract_strided_slice %102 {offsets = [1, 0], sizes = [16, 4], strides = [1, 1]} : vector<18x4xbf16> to vector<16x4xbf16>
    %105 = vector.extract_strided_slice %102 {offsets = [2, 0], sizes = [16, 4], strides = [1, 1]} : vector<18x4xbf16> to vector<16x4xbf16>
    %c0_72 = arith.constant 0 : index
    %c8 = arith.constant 8 : index
    %c0_73 = arith.constant 0 : index
    %c0_74 = arith.constant 0 : index
    %106 = vector.load %arg3[%c0_72, %c8, %c0_73, %c0_74] : memref<1x16x18x4xbf16, #tpu.memory_space<vmem>>, vector<1x1x18x4xbf16>
    %107 = vector.shape_cast %106 : vector<1x1x18x4xbf16> to vector<18x4xbf16>
    %108 = vector.extract_strided_slice %107 {offsets = [0, 0], sizes = [16, 4], strides = [1, 1]} : vector<18x4xbf16> to vector<16x4xbf16>
    %109 = vector.extract_strided_slice %107 {offsets = [1, 0], sizes = [16, 4], strides = [1, 1]} : vector<18x4xbf16> to vector<16x4xbf16>
    %110 = vector.extract_strided_slice %107 {offsets = [2, 0], sizes = [16, 4], strides = [1, 1]} : vector<18x4xbf16> to vector<16x4xbf16>
    %111 = tpu.concatenate %98, %99, %100, %103, %104, %105, %108, %109, %110 in 1 : vector<16x4xbf16>, vector<16x4xbf16>, vector<16x4xbf16>, vector<16x4xbf16>, vector<16x4xbf16>, vector<16x4xbf16>, vector<16x4xbf16>, vector<16x4xbf16>, vector<16x4xbf16> -> vector<16x36xbf16>
    %c0_75 = arith.constant 0 : index
    %c7_76 = arith.constant 7 : index
    %c0_77 = arith.constant 0 : index
    %c0_78 = arith.constant 0 : index
    %112 = vector.load %arg3[%c0_75, %c7_76, %c0_77, %c0_78] : memref<1x16x18x4xbf16, #tpu.memory_space<vmem>>, vector<1x1x18x4xbf16>
    %113 = vector.shape_cast %112 : vector<1x1x18x4xbf16> to vector<18x4xbf16>
    %114 = vector.extract_strided_slice %113 {offsets = [0, 0], sizes = [16, 4], strides = [1, 1]} : vector<18x4xbf16> to vector<16x4xbf16>
    %115 = vector.extract_strided_slice %113 {offsets = [1, 0], sizes = [16, 4], strides = [1, 1]} : vector<18x4xbf16> to vector<16x4xbf16>
    %116 = vector.extract_strided_slice %113 {offsets = [2, 0], sizes = [16, 4], strides = [1, 1]} : vector<18x4xbf16> to vector<16x4xbf16>
    %c0_79 = arith.constant 0 : index
    %c8_80 = arith.constant 8 : index
    %c0_81 = arith.constant 0 : index
    %c0_82 = arith.constant 0 : index
    %117 = vector.load %arg3[%c0_79, %c8_80, %c0_81, %c0_82] : memref<1x16x18x4xbf16, #tpu.memory_space<vmem>>, vector<1x1x18x4xbf16>
    %118 = vector.shape_cast %117 : vector<1x1x18x4xbf16> to vector<18x4xbf16>
    %119 = vector.extract_strided_slice %118 {offsets = [0, 0], sizes = [16, 4], strides = [1, 1]} : vector<18x4xbf16> to vector<16x4xbf16>
    %120 = vector.extract_strided_slice %118 {offsets = [1, 0], sizes = [16, 4], strides = [1, 1]} : vector<18x4xbf16> to vector<16x4xbf16>
    %121 = vector.extract_strided_slice %118 {offsets = [2, 0], sizes = [16, 4], strides = [1, 1]} : vector<18x4xbf16> to vector<16x4xbf16>
    %c0_83 = arith.constant 0 : index
    %c9 = arith.constant 9 : index
    %c0_84 = arith.constant 0 : index
    %c0_85 = arith.constant 0 : index
    %122 = vector.load %arg3[%c0_83, %c9, %c0_84, %c0_85] : memref<1x16x18x4xbf16, #tpu.memory_space<vmem>>, vector<1x1x18x4xbf16>
    %123 = vector.shape_cast %122 : vector<1x1x18x4xbf16> to vector<18x4xbf16>
    %124 = vector.extract_strided_slice %123 {offsets = [0, 0], sizes = [16, 4], strides = [1, 1]} : vector<18x4xbf16> to vector<16x4xbf16>
    %125 = vector.extract_strided_slice %123 {offsets = [1, 0], sizes = [16, 4], strides = [1, 1]} : vector<18x4xbf16> to vector<16x4xbf16>
    %126 = vector.extract_strided_slice %123 {offsets = [2, 0], sizes = [16, 4], strides = [1, 1]} : vector<18x4xbf16> to vector<16x4xbf16>
    %127 = tpu.concatenate %114, %115, %116, %119, %120, %121, %124, %125, %126 in 1 : vector<16x4xbf16>, vector<16x4xbf16>, vector<16x4xbf16>, vector<16x4xbf16>, vector<16x4xbf16>, vector<16x4xbf16>, vector<16x4xbf16>, vector<16x4xbf16>, vector<16x4xbf16> -> vector<16x36xbf16>
    %c0_86 = arith.constant 0 : index
    %c8_87 = arith.constant 8 : index
    %c0_88 = arith.constant 0 : index
    %c0_89 = arith.constant 0 : index
    %128 = vector.load %arg3[%c0_86, %c8_87, %c0_88, %c0_89] : memref<1x16x18x4xbf16, #tpu.memory_space<vmem>>, vector<1x1x18x4xbf16>
    %129 = vector.shape_cast %128 : vector<1x1x18x4xbf16> to vector<18x4xbf16>
    %130 = vector.extract_strided_slice %129 {offsets = [0, 0], sizes = [16, 4], strides = [1, 1]} : vector<18x4xbf16> to vector<16x4xbf16>
    %131 = vector.extract_strided_slice %129 {offsets = [1, 0], sizes = [16, 4], strides = [1, 1]} : vector<18x4xbf16> to vector<16x4xbf16>
    %132 = vector.extract_strided_slice %129 {offsets = [2, 0], sizes = [16, 4], strides = [1, 1]} : vector<18x4xbf16> to vector<16x4xbf16>
    %c0_90 = arith.constant 0 : index
    %c9_91 = arith.constant 9 : index
    %c0_92 = arith.constant 0 : index
    %c0_93 = arith.constant 0 : index
    %133 = vector.load %arg3[%c0_90, %c9_91, %c0_92, %c0_93] : memref<1x16x18x4xbf16, #tpu.memory_space<vmem>>, vector<1x1x18x4xbf16>
    %134 = vector.shape_cast %133 : vector<1x1x18x4xbf16> to vector<18x4xbf16>
    %135 = vector.extract_strided_slice %134 {offsets = [0, 0], sizes = [16, 4], strides = [1, 1]} : vector<18x4xbf16> to vector<16x4xbf16>
    %136 = vector.extract_strided_slice %134 {offsets = [1, 0], sizes = [16, 4], strides = [1, 1]} : vector<18x4xbf16> to vector<16x4xbf16>
    %137 = vector.extract_strided_slice %134 {offsets = [2, 0], sizes = [16, 4], strides = [1, 1]} : vector<18x4xbf16> to vector<16x4xbf16>
    %c0_94 = arith.constant 0 : index
    %c10 = arith.constant 10 : index
    %c0_95 = arith.constant 0 : index
    %c0_96 = arith.constant 0 : index
    %138 = vector.load %arg3[%c0_94, %c10, %c0_95, %c0_96] : memref<1x16x18x4xbf16, #tpu.memory_space<vmem>>, vector<1x1x18x4xbf16>
    %139 = vector.shape_cast %138 : vector<1x1x18x4xbf16> to vector<18x4xbf16>
    %140 = vector.extract_strided_slice %139 {offsets = [0, 0], sizes = [16, 4], strides = [1, 1]} : vector<18x4xbf16> to vector<16x4xbf16>
    %141 = vector.extract_strided_slice %139 {offsets = [1, 0], sizes = [16, 4], strides = [1, 1]} : vector<18x4xbf16> to vector<16x4xbf16>
    %142 = vector.extract_strided_slice %139 {offsets = [2, 0], sizes = [16, 4], strides = [1, 1]} : vector<18x4xbf16> to vector<16x4xbf16>
    %143 = tpu.concatenate %130, %131, %132, %135, %136, %137, %140, %141, %142 in 1 : vector<16x4xbf16>, vector<16x4xbf16>, vector<16x4xbf16>, vector<16x4xbf16>, vector<16x4xbf16>, vector<16x4xbf16>, vector<16x4xbf16>, vector<16x4xbf16>, vector<16x4xbf16> -> vector<16x36xbf16>
    %c0_97 = arith.constant 0 : index
    %c9_98 = arith.constant 9 : index
    %c0_99 = arith.constant 0 : index
    %c0_100 = arith.constant 0 : index
    %144 = vector.load %arg3[%c0_97, %c9_98, %c0_99, %c0_100] : memref<1x16x18x4xbf16, #tpu.memory_space<vmem>>, vector<1x1x18x4xbf16>
    %145 = vector.shape_cast %144 : vector<1x1x18x4xbf16> to vector<18x4xbf16>
    %146 = vector.extract_strided_slice %145 {offsets = [0, 0], sizes = [16, 4], strides = [1, 1]} : vector<18x4xbf16> to vector<16x4xbf16>
    %147 = vector.extract_strided_slice %145 {offsets = [1, 0], sizes = [16, 4], strides = [1, 1]} : vector<18x4xbf16> to vector<16x4xbf16>
    %148 = vector.extract_strided_slice %145 {offsets = [2, 0], sizes = [16, 4], strides = [1, 1]} : vector<18x4xbf16> to vector<16x4xbf16>
    %c0_101 = arith.constant 0 : index
    %c10_102 = arith.constant 10 : index
    %c0_103 = arith.constant 0 : index
    %c0_104 = arith.constant 0 : index
    %149 = vector.load %arg3[%c0_101, %c10_102, %c0_103, %c0_104] : memref<1x16x18x4xbf16, #tpu.memory_space<vmem>>, vector<1x1x18x4xbf16>
    %150 = vector.shape_cast %149 : vector<1x1x18x4xbf16> to vector<18x4xbf16>
    %151 = vector.extract_strided_slice %150 {offsets = [0, 0], sizes = [16, 4], strides = [1, 1]} : vector<18x4xbf16> to vector<16x4xbf16>
    %152 = vector.extract_strided_slice %150 {offsets = [1, 0], sizes = [16, 4], strides = [1, 1]} : vector<18x4xbf16> to vector<16x4xbf16>
    %153 = vector.extract_strided_slice %150 {offsets = [2, 0], sizes = [16, 4], strides = [1, 1]} : vector<18x4xbf16> to vector<16x4xbf16>
    %c0_105 = arith.constant 0 : index
    %c11 = arith.constant 11 : index
    %c0_106 = arith.constant 0 : index
    %c0_107 = arith.constant 0 : index
    %154 = vector.load %arg3[%c0_105, %c11, %c0_106, %c0_107] : memref<1x16x18x4xbf16, #tpu.memory_space<vmem>>, vector<1x1x18x4xbf16>
    %155 = vector.shape_cast %154 : vector<1x1x18x4xbf16> to vector<18x4xbf16>
    %156 = vector.extract_strided_slice %155 {offsets = [0, 0], sizes = [16, 4], strides = [1, 1]} : vector<18x4xbf16> to vector<16x4xbf16>
    %157 = vector.extract_strided_slice %155 {offsets = [1, 0], sizes = [16, 4], strides = [1, 1]} : vector<18x4xbf16> to vector<16x4xbf16>
    %158 = vector.extract_strided_slice %155 {offsets = [2, 0], sizes = [16, 4], strides = [1, 1]} : vector<18x4xbf16> to vector<16x4xbf16>
    %159 = tpu.concatenate %146, %147, %148, %151, %152, %153, %156, %157, %158 in 1 : vector<16x4xbf16>, vector<16x4xbf16>, vector<16x4xbf16>, vector<16x4xbf16>, vector<16x4xbf16>, vector<16x4xbf16>, vector<16x4xbf16>, vector<16x4xbf16>, vector<16x4xbf16> -> vector<16x36xbf16>
    %c0_108 = arith.constant 0 : index
    %c10_109 = arith.constant 10 : index
    %c0_110 = arith.constant 0 : index
    %c0_111 = arith.constant 0 : index
    %160 = vector.load %arg3[%c0_108, %c10_109, %c0_110, %c0_111] : memref<1x16x18x4xbf16, #tpu.memory_space<vmem>>, vector<1x1x18x4xbf16>
    %161 = vector.shape_cast %160 : vector<1x1x18x4xbf16> to vector<18x4xbf16>
    %162 = vector.extract_strided_slice %161 {offsets = [0, 0], sizes = [16, 4], strides = [1, 1]} : vector<18x4xbf16> to vector<16x4xbf16>
    %163 = vector.extract_strided_slice %161 {offsets = [1, 0], sizes = [16, 4], strides = [1, 1]} : vector<18x4xbf16> to vector<16x4xbf16>
    %164 = vector.extract_strided_slice %161 {offsets = [2, 0], sizes = [16, 4], strides = [1, 1]} : vector<18x4xbf16> to vector<16x4xbf16>
    %c0_112 = arith.constant 0 : index
    %c11_113 = arith.constant 11 : index
    %c0_114 = arith.constant 0 : index
    %c0_115 = arith.constant 0 : index
    %165 = vector.load %arg3[%c0_112, %c11_113, %c0_114, %c0_115] : memref<1x16x18x4xbf16, #tpu.memory_space<vmem>>, vector<1x1x18x4xbf16>
    %166 = vector.shape_cast %165 : vector<1x1x18x4xbf16> to vector<18x4xbf16>
    %167 = vector.extract_strided_slice %166 {offsets = [0, 0], sizes = [16, 4], strides = [1, 1]} : vector<18x4xbf16> to vector<16x4xbf16>
    %168 = vector.extract_strided_slice %166 {offsets = [1, 0], sizes = [16, 4], strides = [1, 1]} : vector<18x4xbf16> to vector<16x4xbf16>
    %169 = vector.extract_strided_slice %166 {offsets = [2, 0], sizes = [16, 4], strides = [1, 1]} : vector<18x4xbf16> to vector<16x4xbf16>
    %c0_116 = arith.constant 0 : index
    %c12 = arith.constant 12 : index
    %c0_117 = arith.constant 0 : index
    %c0_118 = arith.constant 0 : index
    %170 = vector.load %arg3[%c0_116, %c12, %c0_117, %c0_118] : memref<1x16x18x4xbf16, #tpu.memory_space<vmem>>, vector<1x1x18x4xbf16>
    %171 = vector.shape_cast %170 : vector<1x1x18x4xbf16> to vector<18x4xbf16>
    %172 = vector.extract_strided_slice %171 {offsets = [0, 0], sizes = [16, 4], strides = [1, 1]} : vector<18x4xbf16> to vector<16x4xbf16>
    %173 = vector.extract_strided_slice %171 {offsets = [1, 0], sizes = [16, 4], strides = [1, 1]} : vector<18x4xbf16> to vector<16x4xbf16>
    %174 = vector.extract_strided_slice %171 {offsets = [2, 0], sizes = [16, 4], strides = [1, 1]} : vector<18x4xbf16> to vector<16x4xbf16>
    %175 = tpu.concatenate %162, %163, %164, %167, %168, %169, %172, %173, %174 in 1 : vector<16x4xbf16>, vector<16x4xbf16>, vector<16x4xbf16>, vector<16x4xbf16>, vector<16x4xbf16>, vector<16x4xbf16>, vector<16x4xbf16>, vector<16x4xbf16>, vector<16x4xbf16> -> vector<16x36xbf16>
    %c0_119 = arith.constant 0 : index
    %c11_120 = arith.constant 11 : index
    %c0_121 = arith.constant 0 : index
    %c0_122 = arith.constant 0 : index
    %176 = vector.load %arg3[%c0_119, %c11_120, %c0_121, %c0_122] : memref<1x16x18x4xbf16, #tpu.memory_space<vmem>>, vector<1x1x18x4xbf16>
    %177 = vector.shape_cast %176 : vector<1x1x18x4xbf16> to vector<18x4xbf16>
    %178 = vector.extract_strided_slice %177 {offsets = [0, 0], sizes = [16, 4], strides = [1, 1]} : vector<18x4xbf16> to vector<16x4xbf16>
    %179 = vector.extract_strided_slice %177 {offsets = [1, 0], sizes = [16, 4], strides = [1, 1]} : vector<18x4xbf16> to vector<16x4xbf16>
    %180 = vector.extract_strided_slice %177 {offsets = [2, 0], sizes = [16, 4], strides = [1, 1]} : vector<18x4xbf16> to vector<16x4xbf16>
    %c0_123 = arith.constant 0 : index
    %c12_124 = arith.constant 12 : index
    %c0_125 = arith.constant 0 : index
    %c0_126 = arith.constant 0 : index
    %181 = vector.load %arg3[%c0_123, %c12_124, %c0_125, %c0_126] : memref<1x16x18x4xbf16, #tpu.memory_space<vmem>>, vector<1x1x18x4xbf16>
    %182 = vector.shape_cast %181 : vector<1x1x18x4xbf16> to vector<18x4xbf16>
    %183 = vector.extract_strided_slice %182 {offsets = [0, 0], sizes = [16, 4], strides = [1, 1]} : vector<18x4xbf16> to vector<16x4xbf16>
    %184 = vector.extract_strided_slice %182 {offsets = [1, 0], sizes = [16, 4], strides = [1, 1]} : vector<18x4xbf16> to vector<16x4xbf16>
    %185 = vector.extract_strided_slice %182 {offsets = [2, 0], sizes = [16, 4], strides = [1, 1]} : vector<18x4xbf16> to vector<16x4xbf16>
    %c0_127 = arith.constant 0 : index
    %c13 = arith.constant 13 : index
    %c0_128 = arith.constant 0 : index
    %c0_129 = arith.constant 0 : index
    %186 = vector.load %arg3[%c0_127, %c13, %c0_128, %c0_129] : memref<1x16x18x4xbf16, #tpu.memory_space<vmem>>, vector<1x1x18x4xbf16>
    %187 = vector.shape_cast %186 : vector<1x1x18x4xbf16> to vector<18x4xbf16>
    %188 = vector.extract_strided_slice %187 {offsets = [0, 0], sizes = [16, 4], strides = [1, 1]} : vector<18x4xbf16> to vector<16x4xbf16>
    %189 = vector.extract_strided_slice %187 {offsets = [1, 0], sizes = [16, 4], strides = [1, 1]} : vector<18x4xbf16> to vector<16x4xbf16>
    %190 = vector.extract_strided_slice %187 {offsets = [2, 0], sizes = [16, 4], strides = [1, 1]} : vector<18x4xbf16> to vector<16x4xbf16>
    %191 = tpu.concatenate %178, %179, %180, %183, %184, %185, %188, %189, %190 in 1 : vector<16x4xbf16>, vector<16x4xbf16>, vector<16x4xbf16>, vector<16x4xbf16>, vector<16x4xbf16>, vector<16x4xbf16>, vector<16x4xbf16>, vector<16x4xbf16>, vector<16x4xbf16> -> vector<16x36xbf16>
    %c0_130 = arith.constant 0 : index
    %c12_131 = arith.constant 12 : index
    %c0_132 = arith.constant 0 : index
    %c0_133 = arith.constant 0 : index
    %192 = vector.load %arg3[%c0_130, %c12_131, %c0_132, %c0_133] : memref<1x16x18x4xbf16, #tpu.memory_space<vmem>>, vector<1x1x18x4xbf16>
    %193 = vector.shape_cast %192 : vector<1x1x18x4xbf16> to vector<18x4xbf16>
    %194 = vector.extract_strided_slice %193 {offsets = [0, 0], sizes = [16, 4], strides = [1, 1]} : vector<18x4xbf16> to vector<16x4xbf16>
    %195 = vector.extract_strided_slice %193 {offsets = [1, 0], sizes = [16, 4], strides = [1, 1]} : vector<18x4xbf16> to vector<16x4xbf16>
    %196 = vector.extract_strided_slice %193 {offsets = [2, 0], sizes = [16, 4], strides = [1, 1]} : vector<18x4xbf16> to vector<16x4xbf16>
    %c0_134 = arith.constant 0 : index
    %c13_135 = arith.constant 13 : index
    %c0_136 = arith.constant 0 : index
    %c0_137 = arith.constant 0 : index
    %197 = vector.load %arg3[%c0_134, %c13_135, %c0_136, %c0_137] : memref<1x16x18x4xbf16, #tpu.memory_space<vmem>>, vector<1x1x18x4xbf16>
    %198 = vector.shape_cast %197 : vector<1x1x18x4xbf16> to vector<18x4xbf16>
    %199 = vector.extract_strided_slice %198 {offsets = [0, 0], sizes = [16, 4], strides = [1, 1]} : vector<18x4xbf16> to vector<16x4xbf16>
    %200 = vector.extract_strided_slice %198 {offsets = [1, 0], sizes = [16, 4], strides = [1, 1]} : vector<18x4xbf16> to vector<16x4xbf16>
    %201 = vector.extract_strided_slice %198 {offsets = [2, 0], sizes = [16, 4], strides = [1, 1]} : vector<18x4xbf16> to vector<16x4xbf16>
    %c0_138 = arith.constant 0 : index
    %c14 = arith.constant 14 : index
    %c0_139 = arith.constant 0 : index
    %c0_140 = arith.constant 0 : index
    %202 = vector.load %arg3[%c0_138, %c14, %c0_139, %c0_140] : memref<1x16x18x4xbf16, #tpu.memory_space<vmem>>, vector<1x1x18x4xbf16>
    %203 = vector.shape_cast %202 : vector<1x1x18x4xbf16> to vector<18x4xbf16>
    %204 = vector.extract_strided_slice %203 {offsets = [0, 0], sizes = [16, 4], strides = [1, 1]} : vector<18x4xbf16> to vector<16x4xbf16>
    %205 = vector.extract_strided_slice %203 {offsets = [1, 0], sizes = [16, 4], strides = [1, 1]} : vector<18x4xbf16> to vector<16x4xbf16>
    %206 = vector.extract_strided_slice %203 {offsets = [2, 0], sizes = [16, 4], strides = [1, 1]} : vector<18x4xbf16> to vector<16x4xbf16>
    %207 = tpu.concatenate %194, %195, %196, %199, %200, %201, %204, %205, %206 in 1 : vector<16x4xbf16>, vector<16x4xbf16>, vector<16x4xbf16>, vector<16x4xbf16>, vector<16x4xbf16>, vector<16x4xbf16>, vector<16x4xbf16>, vector<16x4xbf16>, vector<16x4xbf16> -> vector<16x36xbf16>
    %c0_141 = arith.constant 0 : index
    %c13_142 = arith.constant 13 : index
    %c0_143 = arith.constant 0 : index
    %c0_144 = arith.constant 0 : index
    %208 = vector.load %arg3[%c0_141, %c13_142, %c0_143, %c0_144] : memref<1x16x18x4xbf16, #tpu.memory_space<vmem>>, vector<1x1x18x4xbf16>
    %209 = vector.shape_cast %208 : vector<1x1x18x4xbf16> to vector<18x4xbf16>
    %210 = vector.extract_strided_slice %209 {offsets = [0, 0], sizes = [16, 4], strides = [1, 1]} : vector<18x4xbf16> to vector<16x4xbf16>
    %211 = vector.extract_strided_slice %209 {offsets = [1, 0], sizes = [16, 4], strides = [1, 1]} : vector<18x4xbf16> to vector<16x4xbf16>
    %212 = vector.extract_strided_slice %209 {offsets = [2, 0], sizes = [16, 4], strides = [1, 1]} : vector<18x4xbf16> to vector<16x4xbf16>
    %c0_145 = arith.constant 0 : index
    %c14_146 = arith.constant 14 : index
    %c0_147 = arith.constant 0 : index
    %c0_148 = arith.constant 0 : index
    %213 = vector.load %arg3[%c0_145, %c14_146, %c0_147, %c0_148] : memref<1x16x18x4xbf16, #tpu.memory_space<vmem>>, vector<1x1x18x4xbf16>
    %214 = vector.shape_cast %213 : vector<1x1x18x4xbf16> to vector<18x4xbf16>
    %215 = vector.extract_strided_slice %214 {offsets = [0, 0], sizes = [16, 4], strides = [1, 1]} : vector<18x4xbf16> to vector<16x4xbf16>
    %216 = vector.extract_strided_slice %214 {offsets = [1, 0], sizes = [16, 4], strides = [1, 1]} : vector<18x4xbf16> to vector<16x4xbf16>
    %217 = vector.extract_strided_slice %214 {offsets = [2, 0], sizes = [16, 4], strides = [1, 1]} : vector<18x4xbf16> to vector<16x4xbf16>
    %c0_149 = arith.constant 0 : index
    %c15 = arith.constant 15 : index
    %c0_150 = arith.constant 0 : index
    %c0_151 = arith.constant 0 : index
    %218 = vector.load %arg3[%c0_149, %c15, %c0_150, %c0_151] : memref<1x16x18x4xbf16, #tpu.memory_space<vmem>>, vector<1x1x18x4xbf16>
    %219 = vector.shape_cast %218 : vector<1x1x18x4xbf16> to vector<18x4xbf16>
    %220 = vector.extract_strided_slice %219 {offsets = [0, 0], sizes = [16, 4], strides = [1, 1]} : vector<18x4xbf16> to vector<16x4xbf16>
    %221 = vector.extract_strided_slice %219 {offsets = [1, 0], sizes = [16, 4], strides = [1, 1]} : vector<18x4xbf16> to vector<16x4xbf16>
    %222 = vector.extract_strided_slice %219 {offsets = [2, 0], sizes = [16, 4], strides = [1, 1]} : vector<18x4xbf16> to vector<16x4xbf16>
    %223 = tpu.concatenate %210, %211, %212, %215, %216, %217, %220, %221, %222 in 1 : vector<16x4xbf16>, vector<16x4xbf16>, vector<16x4xbf16>, vector<16x4xbf16>, vector<16x4xbf16>, vector<16x4xbf16>, vector<16x4xbf16>, vector<16x4xbf16>, vector<16x4xbf16> -> vector<16x36xbf16>
    %c0_152 = arith.constant 0 : index
    %c14_153 = arith.constant 14 : index
    %c0_154 = arith.constant 0 : index
    %c0_155 = arith.constant 0 : index
    %224 = vector.load %arg3[%c0_152, %c14_153, %c0_154, %c0_155] : memref<1x16x18x4xbf16, #tpu.memory_space<vmem>>, vector<1x1x18x4xbf16>
    %225 = vector.shape_cast %224 : vector<1x1x18x4xbf16> to vector<18x4xbf16>
    %226 = vector.extract_strided_slice %225 {offsets = [0, 0], sizes = [16, 4], strides = [1, 1]} : vector<18x4xbf16> to vector<16x4xbf16>
    %227 = vector.extract_strided_slice %225 {offsets = [1, 0], sizes = [16, 4], strides = [1, 1]} : vector<18x4xbf16> to vector<16x4xbf16>
    %228 = vector.extract_strided_slice %225 {offsets = [2, 0], sizes = [16, 4], strides = [1, 1]} : vector<18x4xbf16> to vector<16x4xbf16>
    %c0_156 = arith.constant 0 : index
    %c15_157 = arith.constant 15 : index
    %c0_158 = arith.constant 0 : index
    %c0_159 = arith.constant 0 : index
    %229 = vector.load %arg3[%c0_156, %c15_157, %c0_158, %c0_159] : memref<1x16x18x4xbf16, #tpu.memory_space<vmem>>, vector<1x1x18x4xbf16>
    %230 = vector.shape_cast %229 : vector<1x1x18x4xbf16> to vector<18x4xbf16>
    %231 = vector.extract_strided_slice %230 {offsets = [0, 0], sizes = [16, 4], strides = [1, 1]} : vector<18x4xbf16> to vector<16x4xbf16>
    %232 = vector.extract_strided_slice %230 {offsets = [1, 0], sizes = [16, 4], strides = [1, 1]} : vector<18x4xbf16> to vector<16x4xbf16>
    %233 = vector.extract_strided_slice %230 {offsets = [2, 0], sizes = [16, 4], strides = [1, 1]} : vector<18x4xbf16> to vector<16x4xbf16>
    %c0_160 = arith.constant 0 : index
    %c0_161 = arith.constant 0 : index
    %c0_162 = arith.constant 0 : index
    %c0_163 = arith.constant 0 : index
    %234 = vector.load %arg4[%c0_160, %c0_161, %c0_162, %c0_163] : memref<1x16x18x4xbf16, #tpu.memory_space<vmem>>, vector<1x1x18x4xbf16>
    %235 = vector.shape_cast %234 : vector<1x1x18x4xbf16> to vector<18x4xbf16>
    %236 = vector.extract_strided_slice %235 {offsets = [0, 0], sizes = [16, 4], strides = [1, 1]} : vector<18x4xbf16> to vector<16x4xbf16>
    %237 = vector.extract_strided_slice %235 {offsets = [1, 0], sizes = [16, 4], strides = [1, 1]} : vector<18x4xbf16> to vector<16x4xbf16>
    %238 = vector.extract_strided_slice %235 {offsets = [2, 0], sizes = [16, 4], strides = [1, 1]} : vector<18x4xbf16> to vector<16x4xbf16>
    %239 = tpu.concatenate %226, %227, %228, %231, %232, %233, %236, %237, %238 in 1 : vector<16x4xbf16>, vector<16x4xbf16>, vector<16x4xbf16>, vector<16x4xbf16>, vector<16x4xbf16>, vector<16x4xbf16>, vector<16x4xbf16>, vector<16x4xbf16>, vector<16x4xbf16> -> vector<16x36xbf16>
    %c0_164 = arith.constant 0 : index
    %c15_165 = arith.constant 15 : index
    %c0_166 = arith.constant 0 : index
    %c0_167 = arith.constant 0 : index
    %240 = vector.load %arg3[%c0_164, %c15_165, %c0_166, %c0_167] : memref<1x16x18x4xbf16, #tpu.memory_space<vmem>>, vector<1x1x18x4xbf16>
    %241 = vector.shape_cast %240 : vector<1x1x18x4xbf16> to vector<18x4xbf16>
    %242 = vector.extract_strided_slice %241 {offsets = [0, 0], sizes = [16, 4], strides = [1, 1]} : vector<18x4xbf16> to vector<16x4xbf16>
    %243 = vector.extract_strided_slice %241 {offsets = [1, 0], sizes = [16, 4], strides = [1, 1]} : vector<18x4xbf16> to vector<16x4xbf16>
    %244 = vector.extract_strided_slice %241 {offsets = [2, 0], sizes = [16, 4], strides = [1, 1]} : vector<18x4xbf16> to vector<16x4xbf16>
    %c0_168 = arith.constant 0 : index
    %c0_169 = arith.constant 0 : index
    %c0_170 = arith.constant 0 : index
    %c0_171 = arith.constant 0 : index
    %245 = vector.load %arg4[%c0_168, %c0_169, %c0_170, %c0_171] : memref<1x16x18x4xbf16, #tpu.memory_space<vmem>>, vector<1x1x18x4xbf16>
    %246 = vector.shape_cast %245 : vector<1x1x18x4xbf16> to vector<18x4xbf16>
    %247 = vector.extract_strided_slice %246 {offsets = [0, 0], sizes = [16, 4], strides = [1, 1]} : vector<18x4xbf16> to vector<16x4xbf16>
    %248 = vector.extract_strided_slice %246 {offsets = [1, 0], sizes = [16, 4], strides = [1, 1]} : vector<18x4xbf16> to vector<16x4xbf16>
    %249 = vector.extract_strided_slice %246 {offsets = [2, 0], sizes = [16, 4], strides = [1, 1]} : vector<18x4xbf16> to vector<16x4xbf16>
    %c0_172 = arith.constant 0 : index
    %c1_173 = arith.constant 1 : index
    %c0_174 = arith.constant 0 : index
    %c0_175 = arith.constant 0 : index
    %250 = vector.load %arg4[%c0_172, %c1_173, %c0_174, %c0_175] : memref<1x16x18x4xbf16, #tpu.memory_space<vmem>>, vector<1x1x18x4xbf16>
    %251 = vector.shape_cast %250 : vector<1x1x18x4xbf16> to vector<18x4xbf16>
    %252 = vector.extract_strided_slice %251 {offsets = [0, 0], sizes = [16, 4], strides = [1, 1]} : vector<18x4xbf16> to vector<16x4xbf16>
    %253 = vector.extract_strided_slice %251 {offsets = [1, 0], sizes = [16, 4], strides = [1, 1]} : vector<18x4xbf16> to vector<16x4xbf16>
    %254 = vector.extract_strided_slice %251 {offsets = [2, 0], sizes = [16, 4], strides = [1, 1]} : vector<18x4xbf16> to vector<16x4xbf16>
    %255 = tpu.concatenate %242, %243, %244, %247, %248, %249, %252, %253, %254 in 1 : vector<16x4xbf16>, vector<16x4xbf16>, vector<16x4xbf16>, vector<16x4xbf16>, vector<16x4xbf16>, vector<16x4xbf16>, vector<16x4xbf16>, vector<16x4xbf16>, vector<16x4xbf16> -> vector<16x36xbf16>
    %256 = tpu.concatenate %15, %31, %47, %63, %79, %95, %111, %127, %143, %159, %175, %191, %207, %223, %239, %255 in 0 : vector<16x36xbf16>, vector<16x36xbf16>, vector<16x36xbf16>, vector<16x36xbf16>, vector<16x36xbf16>, vector<16x36xbf16>, vector<16x36xbf16>, vector<16x36xbf16>, vector<16x36xbf16>, vector<16x36xbf16>, vector<16x36xbf16>, vector<16x36xbf16>, vector<16x36xbf16>, vector<16x36xbf16>, vector<16x36xbf16>, vector<16x36xbf16> -> vector<256x36xbf16>
    %cst = arith.constant 0.000000e+00 : bf16
    %257 = vector.broadcast %cst : bf16 to vector<256x12xbf16>
    %258 = tpu.concatenate %256, %257 in 1 : vector<256x36xbf16>, vector<256x12xbf16> -> vector<256x48xbf16>
    %c0_176 = arith.constant 0 : index
    %c0_177 = arith.constant 0 : index
    %259 = vector.load %arg5[%c0_176, %c0_177] : memref<48x128xbf16, #tpu.memory_space<vmem>>, vector<48x128xbf16>
    %cst_178 = arith.constant dense<0.000000e+00> : vector<256x128xf32>
    %260 = tpu.matmul %258, %259, %cst_178 {dimension_numbers = #tpu.dot_dimension_numbers<[1], [0], [0], [1], [0, 0, 1, 1], [], []>} : vector<256x48xbf16>, vector<48x128xbf16>, vector<256x128xf32> -> vector<256x128xf32>
    %261 = arith.truncf %260 : vector<256x128xf32> to vector<256x128xbf16>
    %c0_179 = arith.constant 0 : index
    %c0_180 = arith.constant 0 : index
    %262 = vector.load %arg6[%c0_179, %c0_180] : memref<256x128xbf16, #tpu.memory_space<vmem>>, vector<256x128xbf16>
    tpu.vector_store %arg6[%c0_179, %c0_180], %261 {strides = array<i32>} : memref<256x128xbf16, #tpu.memory_space<vmem>>, vector<256x128xbf16>,
    %cst_181 = arith.constant dense<0.000000e+00> : vector<128xf32>
    %263 = vector.multi_reduction <add>, %260, %cst_181 [0] : vector<256x128xf32> to vector<128xf32>
    %264 = vector.shape_cast %263 : vector<128xf32> to vector<1x128xf32>
    %265 = arith.mulf %260, %260 : vector<256x128xf32>
    %cst_182 = arith.constant dense<0.000000e+00> : vector<128xf32>
    %266 = vector.multi_reduction <add>, %265, %cst_182 [0] : vector<256x128xf32> to vector<128xf32>
    %267 = vector.shape_cast %266 : vector<128xf32> to vector<1x128xf32>
    %268 = vector.shape_cast %264 : vector<1x128xf32> to vector<1x1x128xf32>
    %c0_183 = arith.constant 0 : index
    %c0_184 = arith.constant 0 : index
    %c0_185 = arith.constant 0 : index
    %269 = vector.load %arg7[%c0_183, %c0_184, %c0_185] : memref<1x2x128xf32, #tpu.memory_space<vmem>>, vector<1x1x128xf32>
    tpu.vector_store %arg7[%c0_183, %c0_184, %c0_185], %268 {strides = array<i32>} : memref<1x2x128xf32, #tpu.memory_space<vmem>>, vector<1x1x128xf32>,
    %270 = vector.shape_cast %267 : vector<1x128xf32> to vector<1x1x128xf32>
    %c0_186 = arith.constant 0 : index
    %c1_187 = arith.constant 1 : index
    %c0_188 = arith.constant 0 : index
    %271 = vector.load %arg7[%c0_186, %c1_187, %c0_188] : memref<1x2x128xf32, #tpu.memory_space<vmem>>, vector<1x1x128xf32>
    tpu.vector_store %arg7[%c0_186, %c1_187, %c0_188], %270 {strides = array<i32>} : memref<1x2x128xf32, #tpu.memory_space<vmem>>, vector<1x1x128xf32>,
    return
  }
  func.func @transform_0(%arg0: i32, %arg1: i32, %arg2: i32) -> (i32, i32, i32, i32) {
    %c0_i32 = arith.constant 0 : i32
    %c0_i32_0 = arith.constant 0 : i32
    %c0_i32_1 = arith.constant 0 : i32
    return %arg0, %arg1, %c0_i32, %c0_i32_0 : i32, i32, i32, i32
  }
  func.func @transform_1(%arg0: i32, %arg1: i32, %arg2: i32) -> (i32, i32, i32, i32) {
    %c1_i32 = arith.constant 1 : i32
    %0 = arith.addi %arg1, %c1_i32 : i32
    %c0_i32 = arith.constant 0 : i32
    %c0_i32_0 = arith.constant 0 : i32
    %c0_i32_1 = arith.constant 0 : i32
    return %arg0, %0, %c0_i32, %c0_i32_0 : i32, i32, i32, i32
  }
  func.func @transform_2(%arg0: i32, %arg1: i32, %arg2: i32) -> (i32, i32) {
    %c0_i32 = arith.constant 0 : i32
    %c0_i32_0 = arith.constant 0 : i32
    return %c0_i32, %arg2 : i32, i32
  }
  func.func @transform_3(%arg0: i32, %arg1: i32, %arg2: i32) -> (i32, i32) {
    %c1_i32 = arith.constant 1 : i32
    %0 = arith.muli %arg0, %c1_i32 : i32
    %1 = arith.addi %0, %arg1 : i32
    %c0_i32 = arith.constant 0 : i32
    return %1, %arg2 : i32, i32
  }
  func.func @transform_4(%arg0: i32, %arg1: i32, %arg2: i32) -> (i32, i32, i32) {
    %c1_i32 = arith.constant 1 : i32
    %0 = arith.muli %arg0, %c1_i32 : i32
    %1 = arith.addi %0, %arg1 : i32
    %c0_i32 = arith.constant 0 : i32
    %c0_i32_0 = arith.constant 0 : i32
    return %1, %c0_i32, %arg2 : i32, i32, i32
  }
}

module attributes {stable_mosaic.version = 11 : i64} {
  func.func @_bn_relu_kernel(%arg0: i32, %arg1: i32, %arg2: memref<512x128xbf16, #tpu.memory_space<vmem>>, %arg3: memref<1x128xf32, #tpu.memory_space<vmem>>, %arg4: memref<1x128xf32, #tpu.memory_space<vmem>>, %arg5: memref<512x128xf32, #tpu.memory_space<vmem>>) attributes {dimension_semantics = [#tpu.dimension_semantics<parallel>, #tpu.dimension_semantics<arbitrary>], iteration_bounds = array<i64: 1, 1>, scalar_prefetch = 0 : i64, scratch_operands = 0 : i64, tpu.core_type = #tpu.core_type<tc>, window_params = [{transform_indices = @transform_0, window_bounds = array<i64: 512, 128>}, {transform_indices = @transform_1, window_bounds = array<i64: 1, 128>}, {transform_indices = @transform_2, window_bounds = array<i64: 1, 128>}, {transform_indices = @transform_3, window_bounds = array<i64: 512, 128>}]} {
    %c0 = arith.constant 0 : index
    %c0_0 = arith.constant 0 : index
    %0 = vector.load %arg2[%c0, %c0_0] : memref<512x128xbf16, #tpu.memory_space<vmem>>, vector<512x128xbf16>
    %1 = arith.extf %0 : vector<512x128xbf16> to vector<512x128xf32>
    %c0_1 = arith.constant 0 : index
    %c0_2 = arith.constant 0 : index
    %2 = vector.load %arg3[%c0_1, %c0_2] : memref<1x128xf32, #tpu.memory_space<vmem>>, vector<1x128xf32>
    %3 = vector.broadcast %2 : vector<1x128xf32> to vector<512x128xf32>
    %4 = arith.mulf %1, %3 : vector<512x128xf32>
    %c0_3 = arith.constant 0 : index
    %c0_4 = arith.constant 0 : index
    %5 = vector.load %arg4[%c0_3, %c0_4] : memref<1x128xf32, #tpu.memory_space<vmem>>, vector<1x128xf32>
    %6 = vector.broadcast %5 : vector<1x128xf32> to vector<512x128xf32>
    %7 = arith.addf %4, %6 : vector<512x128xf32>
    %cst = arith.constant 0.000000e+00 : f32
    %8 = vector.broadcast %cst : f32 to vector<512x128xf32>
    %9 = arith.maximumf %7, %8 : vector<512x128xf32>
    %c0_5 = arith.constant 0 : index
    %c0_6 = arith.constant 0 : index
    %10 = vector.load %arg5[%c0_5, %c0_6] : memref<512x128xf32, #tpu.memory_space<vmem>>, vector<512x128xf32>
    tpu.vector_store %arg5[%c0_5, %c0_6], %9 {strides = array<i32>} : memref<512x128xf32, #tpu.memory_space<vmem>>, vector<512x128xf32>,
    return
  }
  func.func @transform_0(%arg0: i32, %arg1: i32) -> (i32, i32) {
    %c0_i32 = arith.constant 0 : i32
    return %arg0, %arg1 : i32, i32
  }
  func.func @transform_1(%arg0: i32, %arg1: i32) -> (i32, i32) {
    %c0_i32 = arith.constant 0 : i32
    %c0_i32_0 = arith.constant 0 : i32
    return %c0_i32, %arg1 : i32, i32
  }
  func.func @transform_2(%arg0: i32, %arg1: i32) -> (i32, i32) {
    %c0_i32 = arith.constant 0 : i32
    %c0_i32_0 = arith.constant 0 : i32
    return %c0_i32, %arg1 : i32, i32
  }
  func.func @transform_3(%arg0: i32, %arg1: i32) -> (i32, i32) {
    %c0_i32 = arith.constant 0 : i32
    return %arg0, %arg1 : i32, i32
  }
}

</mosaic_0001>

<llo_original>
// kernel: conv_bn_relu.3
$region0: #{conv_bn_relu.3}
  #allocation0 [shape = 'u32[]', space=smem, size = 0x4, offset = 0x4, fixed_abs, tag = 'smem constant byte address 0x4 - core index']
  #allocation1 [shape = 'u32[144,128]{1,0:T(1,128)}', space=vmem, size = 0x12000, scoped, tag = 'internal scratch']
  %s0 = inlined_call_operand.vmem [shape: bf16[512,128], index: 0, kind: input, shape index: {}]
  %s1 = inlined_call_operand.vmem [shape: f32[1,128], index: 1, kind: input, shape index: {}]
  %s2 = inlined_call_operand.vmem [shape: f32[1,128], index: 2, kind: input, shape index: {}]
  %s3 = inlined_call_operand.vmem [shape: f32[512,128], index: 3, kind: output, shape index: {}]
  %s4 = sld [smem:[#allocation0]]
  $region22: #{conv_bn_relu.3} parent=0
    _
  %s6 = ssub.s32 1, %s4
  %s7 = scalar_select 0, %s6, %s4
  // Predicated region
  $region2: #{conv_bn_relu.3} parent=0 // pred_check
    _
  $region3: #{conv_bn_relu.3} parent=0 // pred_check_branch
    %9 = sbr.rel (0) target = $region5
  $region4: #{conv_bn_relu.3} parent=0 // pred_region
    _
  $region5: #{conv_bn_relu.3} parent=0 // pred_fallthru
    _
  // Predicated region
  $region6: #{conv_bn_relu.3} parent=0 // pred_check
    _
  $region7: #{conv_bn_relu.3} parent=0 // pred_check_branch
    %11 = sbr.rel (0) target = $region9
  $region8: #{conv_bn_relu.3} parent=0 // pred_region
    _
  $region9: #{conv_bn_relu.3} parent=0 // pred_fallthru
    _
  // Predicated region
  $region10: #{conv_bn_relu.3} parent=0 // pred_check
    _
  $region11: #{conv_bn_relu.3} parent=0 // pred_check_branch
    %13 = sbr.rel (0) target = $region13
  $region12: #{conv_bn_relu.3} parent=0 // pred_region
    _
  $region13: #{conv_bn_relu.3} parent=0 // pred_fallthru
    _
  %v14 = vld [vmem:[%s0] sm:$0xf]
  %v15 = vld [vmem:[%s0 + $0x4] sm:$0xf]
  %v16 = vld [vmem:[%s0 + $0x8] sm:$0xf]
  %v17 = vld [vmem:[%s0 + $0xc] sm:$0xf]
  %v18 = vld [vmem:[%s0 + $0x10] sm:$0xf]
  %v19 = vld [vmem:[%s0 + $0x14] sm:$0xf]
  %v20 = vld [vmem:[%s0 + $0x18] sm:$0xf]
  %v21 = vld [vmem:[%s0 + $0x1c] sm:$0xf]
  %v22 = vld [vmem:[%s0 + $0x20] sm:$0xf]
  %v23 = vld [vmem:[%s0 + $0x24] sm:$0xf]
  %v24 = vld [vmem:[%s0 + $0x28] sm:$0xf]
  %v25 = vld [vmem:[%s0 + $0x2c] sm:$0xf]
  %v26 = vld [vmem:[%s0 + $0x30] sm:$0xf]
  %v27 = vld [vmem:[%s0 + $0x34] sm:$0xf]
  %v28 = vld [vmem:[%s0 + $0x38] sm:$0xf]
  %v29 = vld [vmem:[%s0 + $0x3c] sm:$0xf]
  %v30 = vld [vmem:[%s0 + $0x40] sm:$0xf]
  %v31 = vld [vmem:[%s0 + $0x44] sm:$0xf]
  %v32 = vld [vmem:[%s0 + $0x48] sm:$0xf]
  %v33 = vld [vmem:[%s0 + $0x4c] sm:$0xf]
  %v34 = vld [vmem:[%s0 + $0x50] sm:$0xf]
  %v35 = vld [vmem:[%s0 + $0x54] sm:$0xf]
  %v36 = vld [vmem:[%s0 + $0x58] sm:$0xf]
  %v37 = vld [vmem:[%s0 + $0x5c] sm:$0xf]
  %v38 = vld [vmem:[%s0 + $0x60] sm:$0xf]
  %v39 = vld [vmem:[%s0 + $0x64] sm:$0xf]
  %v40 = vld [vmem:[%s0 + $0x68] sm:$0xf]
  %v41 = vld [vmem:[%s0 + $0x6c] sm:$0xf]
  %v42 = vld [vmem:[%s0 + $0x70] sm:$0xf]
  %v43 = vld [vmem:[%s0 + $0x74] sm:$0xf]
  %v44 = vld [vmem:[%s0 + $0x78] sm:$0xf]
  %v45 = vld [vmem:[%s0 + $0x7c] sm:$0xf]
  %v46 = vld [vmem:[%s0 + $0x80] sm:$0xf]
  %v47 = vld [vmem:[%s0 + $0x84] sm:$0xf]
  %v48 = vld [vmem:[%s0 + $0x88] sm:$0xf]
  %v49 = vld [vmem:[%s0 + $0x8c] sm:$0xf]
  %v50 = vld [vmem:[%s0 + $0x90] sm:$0xf]
  %v51 = vld [vmem:[%s0 + $0x94] sm:$0xf]
  %v52 = vld [vmem:[%s0 + $0x98] sm:$0xf]
  %v53 = vld [vmem:[%s0 + $0x9c] sm:$0xf]
  %v54 = vld [vmem:[%s0 + $0xa0] sm:$0xf]
  %v55 = vld [vmem:[%s0 + $0xa4] sm:$0xf]
  %v56 = vld [vmem:[%s0 + $0xa8] sm:$0xf]
  %v57 = vld [vmem:[%s0 + $0xac] sm:$0xf]
  %v58 = vld [vmem:[%s0 + $0xb0] sm:$0xf]
  %v59 = vld [vmem:[%s0 + $0xb4] sm:$0xf]
  %v60 = vld [vmem:[%s0 + $0xb8] sm:$0xf]
  %v61 = vld [vmem:[%s0 + $0xbc] sm:$0xf]
  %v62 = vld [vmem:[%s0 + $0xc0] sm:$0xf]
  %v63 = vld [vmem:[%s0 + $0xc4] sm:$0xf]
  %v64 = vld [vmem:[%s0 + $0xc8] sm:$0xf]
  %v65 = vld [vmem:[%s0 + $0xcc] sm:$0xf]
  %v66 = vld [vmem:[%s0 + $0xd0] sm:$0xf]
  %v67 = vld [vmem:[%s0 + $0xd4] sm:$0xf]
  %v68 = vld [vmem:[%s0 + $0xd8] sm:$0xf]
  %v69 = vld [vmem:[%s0 + $0xdc] sm:$0xf]
  %v70 = vld [vmem:[%s0 + $0xe0] sm:$0xf]
  %v71 = vld [vmem:[%s0 + $0xe4] sm:$0xf]
  %v72 = vld [vmem:[%s0 + $0xe8] sm:$0xf]
  %v73 = vld [vmem:[%s0 + $0xec] sm:$0xf]
  %v74 = vld [vmem:[%s0 + $0xf0] sm:$0xf]
  %v75 = vld [vmem:[%s0 + $0xf4] sm:$0xf]
  %v76 = vld [vmem:[%s0 + $0xf8] sm:$0xf]
  %v77 = vld [vmem:[%s0 + $0xfc] sm:$0xf]
  %v78 = vunpack.c.l.bf16 %v14
  %v79 = vunpack.c.l.bf16 %v15
  %v80 = vunpack.c.l.bf16 %v16
  %v81 = vunpack.c.l.bf16 %v17
  %v82 = vunpack.c.l.bf16 %v18
  %v83 = vunpack.c.l.bf16 %v19
  %v84 = vunpack.c.l.bf16 %v20
  %v85 = vunpack.c.l.bf16 %v21
  %v86 = vunpack.c.l.bf16 %v22
  %v87 = vunpack.c.l.bf16 %v23
  %v88 = vunpack.c.l.bf16 %v24
  %v89 = vunpack.c.l.bf16 %v25
  %v90 = vunpack.c.l.bf16 %v26
  %v91 = vunpack.c.l.bf16 %v27
  %v92 = vunpack.c.l.bf16 %v28
  %v93 = vunpack.c.l.bf16 %v29
  %v94 = vunpack.c.l.bf16 %v30
  %v95 = vunpack.c.l.bf16 %v31
  %v96 = vunpack.c.l.bf16 %v32
  %v97 = vunpack.c.l.bf16 %v33
  %v98 = vunpack.c.l.bf16 %v34
  %v99 = vunpack.c.l.bf16 %v35
  %v100 = vunpack.c.l.bf16 %v36
  %v101 = vunpack.c.l.bf16 %v37
  %v102 = vunpack.c.l.bf16 %v38
  %v103 = vunpack.c.l.bf16 %v39
  %v104 = vunpack.c.l.bf16 %v40
  %v105 = vunpack.c.l.bf16 %v41
  %v106 = vunpack.c.l.bf16 %v42
  %v107 = vunpack.c.l.bf16 %v43
  %v108 = vunpack.c.l.bf16 %v44
  %v109 = vunpack.c.l.bf16 %v45
  %v110 = vunpack.c.l.bf16 %v46
  %v111 = vunpack.c.l.bf16 %v47
  %v112 = vunpack.c.l.bf16 %v48
  %v113 = vunpack.c.l.bf16 %v49
  %v114 = vunpack.c.l.bf16 %v50
  %v115 = vunpack.c.l.bf16 %v51
  %v116 = vunpack.c.l.bf16 %v52
  %v117 = vunpack.c.l.bf16 %v53
  %v118 = vunpack.c.l.bf16 %v54
  %v119 = vunpack.c.l.bf16 %v55
  %v120 = vunpack.c.l.bf16 %v56
  %v121 = vunpack.c.l.bf16 %v57
  %v122 = vunpack.c.l.bf16 %v58
  %v123 = vunpack.c.l.bf16 %v59
  %v124 = vunpack.c.l.bf16 %v60
  %v125 = vunpack.c.l.bf16 %v61
  %v126 = vunpack.c.l.bf16 %v62
  %v127 = vunpack.c.l.bf16 %v63
  %v128 = vunpack.c.l.bf16 %v64
  %v129 = vunpack.c.l.bf16 %v65
  %v130 = vunpack.c.l.bf16 %v66
  %v131 = vunpack.c.l.bf16 %v67
  %v132 = vunpack.c.l.bf16 %v68
  %v133 = vunpack.c.l.bf16 %v69
  %v134 = vunpack.c.l.bf16 %v70
  %v135 = vunpack.c.l.bf16 %v71
  %v136 = vunpack.c.l.bf16 %v72
  %v137 = vunpack.c.l.bf16 %v73
  %v138 = vunpack.c.l.bf16 %v74
  %v139 = vunpack.c.l.bf16 %v75
  %v140 = vunpack.c.l.bf16 %v76
  %v141 = vunpack.c.l.bf16 %v77
  %v142 = vld [vmem:[%s1] sm:$0x1]
  %v144 = vlaneseq
  %v145 = vshrl.u32 %v144, 7
  %v146 = vsub.s32 0, %v145
  %v147 = vrot.slane %v142, %v146
  %v149 = vmul.f32 %v78, %v147
  %v150 = vmul.f32 %v79, %v147
  %v151 = vmul.f32 %v80, %v147
  %v152 = vmul.f32 %v81, %v147
  %v153 = vmul.f32 %v82, %v147
  %v154 = vmul.f32 %v83, %v147
  %v155 = vmul.f32 %v84, %v147
  %v156 = vmul.f32 %v85, %v147
  %v157 = vmul.f32 %v86, %v147
  %v158 = vmul.f32 %v87, %v147
  %v159 = vmul.f32 %v88, %v147
  %v160 = vmul.f32 %v89, %v147
  %v161 = vmul.f32 %v90, %v147
  %v162 = vmul.f32 %v91, %v147
  %v163 = vmul.f32 %v92, %v147
  %v164 = vmul.f32 %v93, %v147
  %v165 = vmul.f32 %v94, %v147
  %v166 = vmul.f32 %v95, %v147
  %v167 = vmul.f32 %v96, %v147
  %v168 = vmul.f32 %v97, %v147
  %v169 = vmul.f32 %v98, %v147
  %v170 = vmul.f32 %v99, %v147
  %v171 = vmul.f32 %v100, %v147
  %v172 = vmul.f32 %v101, %v147
  %v173 = vmul.f32 %v102, %v147
  %v174 = vmul.f32 %v103, %v147
  %v175 = vmul.f32 %v104, %v147
  %v176 = vmul.f32 %v105, %v147
  %v177 = vmul.f32 %v106, %v147
  %v178 = vmul.f32 %v107, %v147
  %v179 = vmul.f32 %v108, %v147
  %v180 = vmul.f32 %v109, %v147
  %v181 = vmul.f32 %v110, %v147
  %v182 = vmul.f32 %v111, %v147
  %v183 = vmul.f32 %v112, %v147
  %v184 = vmul.f32 %v113, %v147
  %v185 = vmul.f32 %v114, %v147
  %v186 = vmul.f32 %v115, %v147
  %v187 = vmul.f32 %v116, %v147
  %v188 = vmul.f32 %v117, %v147
  %v189 = vmul.f32 %v118, %v147
  %v190 = vmul.f32 %v119, %v147
  %v191 = vmul.f32 %v120, %v147
  %v192 = vmul.f32 %v121, %v147
  %v193 = vmul.f32 %v122, %v147
  %v194 = vmul.f32 %v123, %v147
  %v195 = vmul.f32 %v124, %v147
  %v196 = vmul.f32 %v125, %v147
  %v197 = vmul.f32 %v126, %v147
  %v198 = vmul.f32 %v127, %v147
  %v199 = vmul.f32 %v128, %v147
  %v200 = vmul.f32 %v129, %v147
  %v201 = vmul.f32 %v130, %v147
  %v202 = vmul.f32 %v131, %v147
  %v203 = vmul.f32 %v132, %v147
  %v204 = vmul.f32 %v133, %v147
  %v205 = vmul.f32 %v134, %v147
  %v206 = vmul.f32 %v135, %v147
  %v207 = vmul.f32 %v136, %v147
  %v208 = vmul.f32 %v137, %v147
  %v209 = vmul.f32 %v138, %v147
  %v210 = vmul.f32 %v139, %v147
  %v211 = vmul.f32 %v140, %v147
  %v212 = vmul.f32 %v141, %v147
  %v213 = vld [vmem:[%s2] sm:$0x1]
  %v215 = vlaneseq
  %v216 = vshrl.u32 %v215, 7
  %v217 = vsub.s32 0, %v216
  %v218 = vrot.slane %v213, %v217
  %v220 = vadd.f32 %v149, %v218
  %v221 = vadd.f32 %v150, %v218
  %v222 = vadd.f32 %v151, %v218
  %v223 = vadd.f32 %v152, %v218
  %v224 = vadd.f32 %v153, %v218
  %v225 = vadd.f32 %v154, %v218
  %v226 = vadd.f32 %v155, %v218
  %v227 = vadd.f32 %v156, %v218
  %v228 = vadd.f32 %v157, %v218
  %v229 = vadd.f32 %v158, %v218
  %v230 = vadd.f32 %v159, %v218
  %v231 = vadd.f32 %v160, %v218
  %v232 = vadd.f32 %v161, %v218
  %v233 = vadd.f32 %v162, %v218
  %v234 = vadd.f32 %v163, %v218
  %v235 = vadd.f32 %v164, %v218
  %v236 = vadd.f32 %v165, %v218
  %v237 = vadd.f32 %v166, %v218
  %v238 = vadd.f32 %v167, %v218
  %v239 = vadd.f32 %v168, %v218
  %v240 = vadd.f32 %v169, %v218
  %v241 = vadd.f32 %v170, %v218
  %v242 = vadd.f32 %v171, %v218
  %v243 = vadd.f32 %v172, %v218
  %v244 = vadd.f32 %v173, %v218
  %v245 = vadd.f32 %v174, %v218
  %v246 = vadd.f32 %v175, %v218
  %v247 = vadd.f32 %v176, %v218
  %v248 = vadd.f32 %v177, %v218
  %v249 = vadd.f32 %v178, %v218
  %v250 = vadd.f32 %v179, %v218
  %v251 = vadd.f32 %v180, %v218
  %v252 = vadd.f32 %v181, %v218
  %v253 = vadd.f32 %v182, %v218
  %v254 = vadd.f32 %v183, %v218
  %v255 = vadd.f32 %v184, %v218
  %v256 = vadd.f32 %v185, %v218
  %v257 = vadd.f32 %v186, %v218
  %v258 = vadd.f32 %v187, %v218
  %v259 = vadd.f32 %v188, %v218
  %v260 = vadd.f32 %v189, %v218
  %v261 = vadd.f32 %v190, %v218
  %v262 = vadd.f32 %v191, %v218
  %v263 = vadd.f32 %v192, %v218
  %v264 = vadd.f32 %v193, %v218
  %v265 = vadd.f32 %v194, %v218
  %v266 = vadd.f32 %v195, %v218
  %v267 = vadd.f32 %v196, %v218
  %v268 = vadd.f32 %v197, %v218
  %v269 = vadd.f32 %v198, %v218
  %v270 = vadd.f32 %v199, %v218
  %v271 = vadd.f32 %v200, %v218
  %v272 = vadd.f32 %v201, %v218
  %v273 = vadd.f32 %v202, %v218
  %v274 = vadd.f32 %v203, %v218
  %v275 = vadd.f32 %v204, %v218
  %v276 = vadd.f32 %v205, %v218
  %v277 = vadd.f32 %v206, %v218
  %v278 = vadd.f32 %v207, %v218
  %v279 = vadd.f32 %v208, %v218
  %v280 = vadd.f32 %v209, %v218
  %v281 = vadd.f32 %v210, %v218
  %v282 = vadd.f32 %v211, %v218
  %v283 = vadd.f32 %v212, %v218
  %v284 = vmax.f32 %v220, 0.0
  %v285 = vmax.f32 %v221, 0.0
  %v286 = vmax.f32 %v222, 0.0
  %v287 = vmax.f32 %v223, 0.0
  %v288 = vmax.f32 %v224, 0.0
  %v289 = vmax.f32 %v225, 0.0
  %v290 = vmax.f32 %v226, 0.0
  %v291 = vmax.f32 %v227, 0.0
  %v292 = vmax.f32 %v228, 0.0
  %v293 = vmax.f32 %v229, 0.0
  %v294 = vmax.f32 %v230, 0.0
  %v295 = vmax.f32 %v231, 0.0
  %v296 = vmax.f32 %v232, 0.0
  %v297 = vmax.f32 %v233, 0.0
  %v298 = vmax.f32 %v234, 0.0
  %v299 = vmax.f32 %v235, 0.0
  %v300 = vmax.f32 %v236, 0.0
  %v301 = vmax.f32 %v237, 0.0
  %v302 = vmax.f32 %v238, 0.0
  %v303 = vmax.f32 %v239, 0.0
  %v304 = vmax.f32 %v240, 0.0
  %v305 = vmax.f32 %v241, 0.0
  %v306 = vmax.f32 %v242, 0.0
  %v307 = vmax.f32 %v243, 0.0
  %v308 = vmax.f32 %v244, 0.0
  %v309 = vmax.f32 %v245, 0.0
  %v310 = vmax.f32 %v246, 0.0
  %v311 = vmax.f32 %v247, 0.0
  %v312 = vmax.f32 %v248, 0.0
  %v313 = vmax.f32 %v249, 0.0
  %v314 = vmax.f32 %v250, 0.0
  %v315 = vmax.f32 %v251, 0.0
  %v316 = vmax.f32 %v252, 0.0
  %v317 = vmax.f32 %v253, 0.0
  %v318 = vmax.f32 %v254, 0.0
  %v319 = vmax.f32 %v255, 0.0
  %v320 = vmax.f32 %v256, 0.0
  %v321 = vmax.f32 %v257, 0.0
  %v322 = vmax.f32 %v258, 0.0
  %v323 = vmax.f32 %v259, 0.0
  %v324 = vmax.f32 %v260, 0.0
  %v325 = vmax.f32 %v261, 0.0
  %v326 = vmax.f32 %v262, 0.0
  %v327 = vmax.f32 %v263, 0.0
  %v328 = vmax.f32 %v264, 0.0
  %v329 = vmax.f32 %v265, 0.0
  %v330 = vmax.f32 %v266, 0.0
  %v331 = vmax.f32 %v267, 0.0
  %v332 = vmax.f32 %v268, 0.0
  %v333 = vmax.f32 %v269, 0.0
  %v334 = vmax.f32 %v270, 0.0
  %v335 = vmax.f32 %v271, 0.0
  %v336 = vmax.f32 %v272, 0.0
  %v337 = vmax.f32 %v273, 0.0
  %v338 = vmax.f32 %v274, 0.0
  %v339 = vmax.f32 %v275, 0.0
  %v340 = vmax.f32 %v276, 0.0
  %v341 = vmax.f32 %v277, 0.0
  %v342 = vmax.f32 %v278, 0.0
  %v343 = vmax.f32 %v279, 0.0
  %v344 = vmax.f32 %v280, 0.0
  %v345 = vmax.f32 %v281, 0.0
  %v346 = vmax.f32 %v282, 0.0
  %v347 = vmax.f32 %v283, 0.0
  %348 = vst [vmem:[%s3] sm:$0xff] %v284
  %349 = vst [vmem:[%s3 + $0x8] sm:$0xff] %v285
  %350 = vst [vmem:[%s3 + $0x10] sm:$0xff] %v286
  %351 = vst [vmem:[%s3 + $0x18] sm:$0xff] %v287
  %352 = vst [vmem:[%s3 + $0x20] sm:$0xff] %v288
  %353 = vst [vmem:[%s3 + $0x28] sm:$0xff] %v289
  %354 = vst [vmem:[%s3 + $0x30] sm:$0xff] %v290
  %355 = vst [vmem:[%s3 + $0x38] sm:$0xff] %v291
  %356 = vst [vmem:[%s3 + $0x40] sm:$0xff] %v292
  %357 = vst [vmem:[%s3 + $0x48] sm:$0xff] %v293
  %358 = vst [vmem:[%s3 + $0x50] sm:$0xff] %v294
  %359 = vst [vmem:[%s3 + $0x58] sm:$0xff] %v295
  %360 = vst [vmem:[%s3 + $0x60] sm:$0xff] %v296
  %361 = vst [vmem:[%s3 + $0x68] sm:$0xff] %v297
  %362 = vst [vmem:[%s3 + $0x70] sm:$0xff] %v298
  %363 = vst [vmem:[%s3 + $0x78] sm:$0xff] %v299
  %364 = vst [vmem:[%s3 + $0x80] sm:$0xff] %v300
  %365 = vst [vmem:[%s3 + $0x88] sm:$0xff] %v301
  %366 = vst [vmem:[%s3 + $0x90] sm:$0xff] %v302
  %367 = vst [vmem:[%s3 + $0x98] sm:$0xff] %v303
  %368 = vst [vmem:[%s3 + $0xa0] sm:$0xff] %v304
  %369 = vst [vmem:[%s3 + $0xa8] sm:$0xff] %v305
  %370 = vst [vmem:[%s3 + $0xb0] sm:$0xff] %v306
  %371 = vst [vmem:[%s3 + $0xb8] sm:$0xff] %v307
  %372 = vst [vmem:[%s3 + $0xc0] sm:$0xff] %v308
  %373 = vst [vmem:[%s3 + $0xc8] sm:$0xff] %v309
  %374 = vst [vmem:[%s3 + $0xd0] sm:$0xff] %v310
  %375 = vst [vmem:[%s3 + $0xd8] sm:$0xff] %v311
  %376 = vst [vmem:[%s3 + $0xe0] sm:$0xff] %v312
  %377 = vst [vmem:[%s3 + $0xe8] sm:$0xff] %v313
  %378 = vst [vmem:[%s3 + $0xf0] sm:$0xff] %v314
  %379 = vst [vmem:[%s3 + $0xf8] sm:$0xff] %v315
  %380 = vst [vmem:[%s3 + $0x100] sm:$0xff] %v316
  %381 = vst [vmem:[%s3 + $0x108] sm:$0xff] %v317
  %382 = vst [vmem:[%s3 + $0x110] sm:$0xff] %v318
  %383 = vst [vmem:[%s3 + $0x118] sm:$0xff] %v319
  %384 = vst [vmem:[%s3 + $0x120] sm:$0xff] %v320
  %385 = vst [vmem:[%s3 + $0x128] sm:$0xff] %v321
  %386 = vst [vmem:[%s3 + $0x130] sm:$0xff] %v322
  %387 = vst [vmem:[%s3 + $0x138] sm:$0xff] %v323
  %388 = vst [vmem:[%s3 + $0x140] sm:$0xff] %v324
  %389 = vst [vmem:[%s3 + $0x148] sm:$0xff] %v325
  %390 = vst [vmem:[%s3 + $0x150] sm:$0xff] %v326
  %391 = vst [vmem:[%s3 + $0x158] sm:$0xff] %v327
  %392 = vst [vmem:[%s3 + $0x160] sm:$0xff] %v328
  %393 = vst [vmem:[%s3 + $0x168] sm:$0xff] %v329
  %394 = vst [vmem:[%s3 + $0x170] sm:$0xff] %v330
  %395 = vst [vmem:[%s3 + $0x178] sm:$0xff] %v331
  %396 = vst [vmem:[%s3 + $0x180] sm:$0xff] %v332
  %397 = vst [vmem:[%s3 + $0x188] sm:$0xff] %v333
  %398 = vst [vmem:[%s3 + $0x190] sm:$0xff] %v334
  %399 = vst [vmem:[%s3 + $0x198] sm:$0xff] %v335
  %400 = vst [vmem:[%s3 + $0x1a0] sm:$0xff] %v336
  %401 = vst [vmem:[%s3 + $0x1a8] sm:$0xff] %v337
  %402 = vst [vmem:[%s3 + $0x1b0] sm:$0xff] %v338
  %403 = vst [vmem:[%s3 + $0x1b8] sm:$0xff] %v339
  %404 = vst [vmem:[%s3 + $0x1c0] sm:$0xff] %v340
  %405 = vst [vmem:[%s3 + $0x1c8] sm:$0xff] %v341
  %406 = vst [vmem:[%s3 + $0x1d0] sm:$0xff] %v342
  %407 = vst [vmem:[%s3 + $0x1d8] sm:$0xff] %v343
  %408 = vst [vmem:[%s3 + $0x1e0] sm:$0xff] %v344
  %409 = vst [vmem:[%s3 + $0x1e8] sm:$0xff] %v345
  %410 = vst [vmem:[%s3 + $0x1f0] sm:$0xff] %v346
  %411 = vst [vmem:[%s3 + $0x1f8] sm:$0xff] %v347
  // Predicated region
  $region14: #{conv_bn_relu.3} parent=0 // pred_check
    _
  $region15: #{conv_bn_relu.3} parent=0 // pred_check_branch
    %413 = sbr.rel (0) target = $region17
  $region16: #{conv_bn_relu.3} parent=0 // pred_region
    _
  $region17: #{conv_bn_relu.3} parent=0 // pred_fallthru
    _
  // Predicated region
  $region18: #{conv_bn_relu.3} parent=0 // pred_check
    _
  $region19: #{conv_bn_relu.3} parent=0 // pred_check_branch
    %415 = sbr.rel (0) target = $region21
  $region20: #{conv_bn_relu.3} parent=0 // pred_region
    _
  $region21: #{conv_bn_relu.3} parent=0 // pred_fallthru
    _

// kernel: conv_bn_relu.2
$region0: #{conv_bn_relu.2}
  #allocation0 [shape = 'u32[]', space=smem, size = 0x4, offset = 0x4, fixed_abs, tag = 'smem constant byte address 0x4 - core index']
  #allocation1 [shape = 'u32[144,128]{1,0:T(1,128)}', space=vmem, size = 0x12000, scoped, tag = 'internal scratch']
  %s0 = inlined_call_operand.vmem [shape: bf16[2,32,18,4], index: 0, kind: input, shape index: {}, may-alias: {0,1}]
  %s1 = inlined_call_operand.vmem [shape: bf16[2,32,18,4], index: 1, kind: input, shape index: {}, may-alias: {0,1}]
  %s2 = inlined_call_operand.vmem [shape: bf16[48,128], index: 2, kind: input, shape index: {}]
  %s3 = inlined_call_operand.vmem [shape: bf16[512,128], index: 3, kind: output, shape index: {0}]
  %s4 = inlined_call_operand.vmem [shape: f32[2,2,128], index: 4, kind: output, shape index: {1}]
  %5 = xla_tuple %s3, %s4
  %s6 = sld [smem:[#allocation0]]
  $region53: #{conv_bn_relu.2} parent=0
    _
  %s8 = ssub.s32 1, %s6
  %s9 = scalar_select 0, %s8, %s6
  loop: start=0, step=1, limit=4
  $region2: #{conv_bn_relu.2} parent=0 // loop_pre_header
    _
  $region3: #{conv_bn_relu.2} parent=0 // loop_header
    %s11 = sphi 0, %s15
    %p12 = scmp.ge.s32.totalorder %s11, 4
    %s18 = sphi 0, %s37
    %s19 = sphi 0, %s33
    %s20 = sphi 0, %s29
    %s21 = sphi 0, %s18
    %s22 = sphi 0, %s19
    %s23 = sphi 0, %s20
    %s24 = sphi 0, %s21
    %s25 = sphi 0, %s22
    %s26 = sphi 0, %s23
    %s42 = sphi 0, %s44
    %s45 = sphi 0, %s42
    %s46 = sphi 0, %s45
    %s62 = sphi 0, %s46
    %s72 = sphi 0, %s74
    %s75 = sphi 0, %s72
    %s76 = sphi 0, %s75
    %s92 = sphi 0, %s76
    %s98 = sphi 0, %s100
    %s101 = sphi 0, %s98
    %s102 = sphi 0, %s101
    %s118 = sphi 0, %s102
    %s128 = sphi 0, %s130
    %s131 = sphi 0, %s128
    %s132 = sphi 0, %s131
    %s148 = sphi 0, %s132
    %s158 = sphi 0, %s160
    %s161 = sphi 0, %s158
    %s162 = sphi 0, %s161
    %s178 = sphi 0, %s162
  $region4: #{conv_bn_relu.2} parent=0 // loop_header_branch
    %14 = sbr.rel (%p12) target = $region8
  $region5: #{conv_bn_relu.2} parent=0 // loop_body
    %s16 = ssub.s32 %s11, 1
    %s17 = ssub.s32 %s11, 2
    %s27 = sadd.s32 1, %s20
    %p28 = scmp.ge.s32.totalorder %s27, 1
    %s29 = scalar_select %p28, 0, %s27
    %s30 = sadd.s32 1, %s19
    %s31 = scalar_select %p28, %s30, %s19
    %p32 = scmp.ge.s32.totalorder %s31, 1
    %s33 = scalar_select %p32, 0, %s31
    %s34 = sadd.s32 1, %s18
    %s35 = scalar_select %p32, %s34, %s18
    %p36 = scmp.ge.s32.totalorder %s35, 2
    %s37 = scalar_select %p36, 0, %s35
    %s38 = ssub.s32 %s18, %s37
    %s39 = ssub.s32 %s19, %s33
    %s40 = sor.u32 %s38, %s39
    %p41 = scmp.eq.s32.totalorder %s40, 0
    %s43 = sadd.s32 %s42, 1
    %s44 = scalar_select %p41, %s42, %s43
    %p47 = pneg %p41
    %p48 = scmp.eq.s32.totalorder %s11, 1
    %p49 = por %p47, %p48
    %p50 = scmp.ne.s32.totalorder %s42, %s45
    %p51 = scmp.eq.s32.totalorder %s11, 0
    %p52 = por %p50, %p51
    %p53 = scmp.ne.s32.totalorder %s42, %s45
    %p54 = scmp.eq.s32.totalorder %s16, 1
    %p55 = por %p53, %p54
    %p56 = scmp.ne.s32.totalorder %s45, %s46
    %p57 = scmp.eq.s32.totalorder %s16, 0
    %p58 = por %p56, %p57
    %p59 = scmp.ne.s32.totalorder %s45, %s46
    %p60 = scmp.eq.s32.totalorder %s17, 1
    %p61 = por %p59, %p60
    %p63 = scmp.ne.s32.totalorder %s46, %s62
    %p64 = scmp.eq.s32.totalorder %s17, 0
    %p65 = por %p63, %p64
    %s66 = sadd.s32 %s19, 1
    %s67 = sadd.s32 %s33, 1
    %s68 = ssub.s32 %s18, %s37
    %s69 = ssub.s32 %s66, %s67
    %s70 = sor.u32 %s68, %s69
    %p71 = scmp.eq.s32.totalorder %s70, 0
    %s73 = sadd.s32 %s72, 1
    %s74 = scalar_select %p71, %s72, %s73
    %p77 = pneg %p71
    %p78 = scmp.eq.s32.totalorder %s11, 1
    %p79 = por %p77, %p78
    %p80 = scmp.ne.s32.totalorder %s72, %s75
    %p81 = scmp.eq.s32.totalorder %s11, 0
    %p82 = por %p80, %p81
    %p83 = scmp.ne.s32.totalorder %s72, %s75
    %p84 = scmp.eq.s32.totalorder %s16, 1
    %p85 = por %p83, %p84
    %p86 = scmp.ne.s32.totalorder %s75, %s76
    %p87 = scmp.eq.s32.totalorder %s16, 0
    %p88 = por %p86, %p87
    %p89 = scmp.ne.s32.totalorder %s75, %s76
    %p90 = scmp.eq.s32.totalorder %s17, 1
    %p91 = por %p89, %p90
    %p93 = scmp.ne.s32.totalorder %s76, %s92
    %p94 = scmp.eq.s32.totalorder %s17, 0
    %p95 = por %p93, %p94
    %s96 = ssub.s32 %s20, %s29
    %p97 = scmp.eq.s32.totalorder %s96, 0
    %s99 = sadd.s32 %s98, 1
    %s100 = scalar_select %p97, %s98, %s99
    %p103 = pneg %p97
    %p104 = scmp.eq.s32.totalorder %s11, 1
    %p105 = por %p103, %p104
    %p106 = scmp.ne.s32.totalorder %s98, %s101
    %p107 = scmp.eq.s32.totalorder %s11, 0
    %p108 = por %p106, %p107
    %p109 = scmp.ne.s32.totalorder %s98, %s101
    %p110 = scmp.eq.s32.totalorder %s16, 1
    %p111 = por %p109, %p110
    %p112 = scmp.ne.s32.totalorder %s101, %s102
    %p113 = scmp.eq.s32.totalorder %s16, 0
    %p114 = por %p112, %p113
    %p115 = scmp.ne.s32.totalorder %s101, %s102
    %p116 = scmp.eq.s32.totalorder %s17, 1
    %p117 = por %p115, %p116
    %p119 = scmp.ne.s32.totalorder %s102, %s118
    %p120 = scmp.eq.s32.totalorder %s17, 0
    %p121 = por %p119, %p120
    %s122 = sadd.s32 %s18, %s19
    %s123 = sadd.s32 %s37, %s33
    %s124 = ssub.s32 %s122, %s123
    %s125 = ssub.s32 %s20, %s29
    %s126 = sor.u32 %s124, %s125
    %p127 = scmp.eq.s32.totalorder %s126, 0
    %s129 = sadd.s32 %s128, 1
    %s130 = scalar_select %p127, %s128, %s129
    %p133 = pneg %p127
    %p134 = scmp.eq.s32.totalorder %s11, 1
    %p135 = por %p133, %p134
    %p136 = scmp.ne.s32.totalorder %s128, %s131
    %p137 = scmp.eq.s32.totalorder %s11, 0
    %p138 = por %p136, %p137
    %p139 = scmp.ne.s32.totalorder %s128, %s131
    %p140 = scmp.eq.s32.totalorder %s16, 1
    %p141 = por %p139, %p140
    %p142 = scmp.ne.s32.totalorder %s131, %s132
    %p143 = scmp.eq.s32.totalorder %s16, 0
    %p144 = por %p142, %p143
    %p145 = scmp.ne.s32.totalorder %s131, %s132
    %p146 = scmp.eq.s32.totalorder %s17, 1
    %p147 = por %p145, %p146
    %p149 = scmp.ne.s32.totalorder %s132, %s148
    %p150 = scmp.eq.s32.totalorder %s17, 0
    %p151 = por %p149, %p150
    %s152 = sadd.s32 %s18, %s19
    %s153 = sadd.s32 %s37, %s33
    %s154 = ssub.s32 %s152, %s153
    %s155 = ssub.s32 %s20, %s29
    %s156 = sor.u32 %s154, %s155
    %p157 = scmp.eq.s32.totalorder %s156, 0
    %s159 = sadd.s32 %s158, 1
    %s160 = scalar_select %p157, %s158, %s159
    %p163 = pneg %p157
    %p164 = scmp.eq.s32.totalorder %s11, 1
    %p165 = por %p163, %p164
    %p166 = scmp.ne.s32.totalorder %s158, %s161
    %p167 = scmp.eq.s32.totalorder %s11, 0
    %p168 = por %p166, %p167
    %p169 = scmp.ne.s32.totalorder %s158, %s161
    %p170 = scmp.eq.s32.totalorder %s16, 1
    %p171 = por %p169, %p170
    %p172 = scmp.ne.s32.totalorder %s161, %s162
    %p173 = scmp.eq.s32.totalorder %s16, 0
    %p174 = por %p172, %p173
    %p175 = scmp.ne.s32.totalorder %s161, %s162
    %p176 = scmp.eq.s32.totalorder %s17, 1
    %p177 = por %p175, %p176
    %p179 = scmp.ne.s32.totalorder %s162, %s178
    %p180 = scmp.eq.s32.totalorder %s17, 0
    %p181 = por %p179, %p180
    %p182 = scmp.le.s32.totalorder 1, %s11
    %p183 = scmp.lt.s32.totalorder %s11, 3
    %p184 = pnand %p182, %p183
    %p185 = pneg %p184
    // Predicated region
    $region9: #{conv_bn_relu.2} parent=5 // pred_check
      _
    $region10: #{conv_bn_relu.2} parent=5 // pred_check_branch
      %187 = sbr.rel (%p184) target = $region12
    $region11: #{conv_bn_relu.2} parent=5 // pred_region
      %s188 = ssub.s32 %s11, 1
      // Predicated region
      $region13: #{conv_bn_relu.2} parent=11 // pred_check
        %p189 = pneg %p114
      $region14: #{conv_bn_relu.2} parent=11 // pred_check_branch
        %191 = sbr.rel (%p189) target = $region16
      $region15: #{conv_bn_relu.2} parent=11 // pred_region
        %p192 = scmp.lt.s32.totalorder %s23, 0
        %s193 = scalar_select %p192, %s23, 0
        %s194 = smul.addr %s193, 4
        %s195 = scalar_lea.vmem %s2, %s194
      $region16: #{conv_bn_relu.2} parent=11 // pred_fallthru
        _
    $region12: #{conv_bn_relu.2} parent=5 // pred_fallthru
      _
    %p196 = scmp.lt.s32.totalorder %s11, 2
    // Predicated region
    $region17: #{conv_bn_relu.2} parent=5 // pred_check
      %p197 = pneg %p196
    $region18: #{conv_bn_relu.2} parent=5 // pred_check_branch
      %199 = sbr.rel (%p197) target = $region20
    $region19: #{conv_bn_relu.2} parent=5 // pred_region
      // Predicated region
      $region21: #{conv_bn_relu.2} parent=19 // pred_check
        %p200 = pneg %p52
      $region22: #{conv_bn_relu.2} parent=19 // pred_check_branch
        %202 = sbr.rel (%p200) target = $region24
      $region23: #{conv_bn_relu.2} parent=19 // pred_region
        %s203 = smul.u32 16, %s19
        %p204 = scmp.lt.s32.totalorder %s18, 1
        %s205 = scalar_select %p204, %s18, 1
        %p206 = scmp.lt.s32.totalorder %s203, 31
        %s207 = scalar_select %p206, %s203, 31
        %s208 = smul.addr %s207, 3
        %s209 = smul.addr %s205, 96
        %s210 = sadd.s32 %s208, %s209
        %s211 = smul.addr %s210, 4
        %s212 = scalar_lea.vmem %s0, %s211
        %s213 = smul.u32 16, %s19
      $region24: #{conv_bn_relu.2} parent=19 // pred_fallthru
        _
      // Predicated region
      $region25: #{conv_bn_relu.2} parent=19 // pred_check
        %p214 = pneg %p82
      $region26: #{conv_bn_relu.2} parent=19 // pred_check_branch
        %216 = sbr.rel (%p214) target = $region28
      $region27: #{conv_bn_relu.2} parent=19 // pred_region
        %s217 = sadd.s32 %s19, 1
        %s218 = smul.u32 16, %s217
        %p219 = scmp.lt.s32.totalorder %s18, 1
        %s220 = scalar_select %p219, %s18, 1
        %p221 = scmp.lt.s32.totalorder %s218, 31
        %s222 = scalar_select %p221, %s218, 31
        %s223 = smul.addr %s222, 3
        %s224 = smul.addr %s220, 96
        %s225 = sadd.s32 %s223, %s224
        %s226 = smul.addr %s225, 4
        %s227 = scalar_lea.vmem %s1, %s226
        %s228 = sadd.s32 %s19, 1
        %s229 = smul.u32 16, %s228
      $region28: #{conv_bn_relu.2} parent=19 // pred_fallthru
        _
    $region20: #{conv_bn_relu.2} parent=5 // pred_fallthru
      _
    %p230 = scmp.le.s32.totalorder 1, %s11
    %p231 = scmp.lt.s32.totalorder %s11, 3
    %p232 = pnand %p230, %p231
    %p233 = pneg %p232
    // Predicated region
    $region29: #{conv_bn_relu.2} parent=5 // pred_check
      _
    $region30: #{conv_bn_relu.2} parent=5 // pred_check_branch
      %235 = sbr.rel (%p232) target = $region32
    $region31: #{conv_bn_relu.2} parent=5 // pred_region
      %s236 = ssub.s32 %s11, 1
      %s237 = smul.u32 16, %s22
      %p238 = scmp.lt.s32.totalorder %s21, 1
      %s239 = scalar_select %p238, %s21, 1
      %p240 = scmp.lt.s32.totalorder %s237, 31
      %s241 = scalar_select %p240, %s237, 31
      %s242 = smul.addr %s241, 3
      %s243 = smul.addr %s239, 96
      %s244 = sadd.s32 %s242, %s243
      %s245 = smul.addr %s244, 4
      %s246 = scalar_lea.vmem %s0, %s245
      %p247 = pneg %p58
      %p248 = pneg %p55
      %s249 = sadd.s32 %s22, 1
      %s250 = smul.u32 16, %s249
      %p251 = scmp.lt.s32.totalorder %s21, 1
      %s252 = scalar_select %p251, %s21, 1
      %p253 = scmp.lt.s32.totalorder %s250, 31
      %s254 = scalar_select %p253, %s250, 31
      %s255 = smul.addr %s254, 3
      %s256 = smul.addr %s252, 96
      %s257 = sadd.s32 %s255, %s256
      %s258 = smul.addr %s257, 4
      %s259 = scalar_lea.vmem %s1, %s258
      %p260 = pneg %p88
      %p261 = pneg %p85
      %p262 = scmp.lt.s32.totalorder %s23, 0
      %s263 = scalar_select %p262, %s23, 0
      %s264 = smul.addr %s263, 4
      %s265 = scalar_lea.vmem %s2, %s264
      %p266 = pneg %p114
      %p267 = pneg %p111
      %p268 = pneg %p144
      %p269 = pneg %p141
      %s270 = sadd.s32 %s21, %s22
      %s271 = smul.u32 32, %s270
      %p272 = scmp.lt.s32.totalorder %s271, 63
      %s273 = scalar_select %p272, %s271, 63
      %p274 = scmp.lt.s32.totalorder %s23, 0
      %s275 = scalar_select %p274, %s23, 0
      %s276 = sadd.s32 %s275, %s273
      %s277 = smul.addr %s276, 4
      %s278 = scalar_lea.vmem %s3, %s277
      %p279 = pneg %p174
      %p280 = pneg %p171
      %s281 = sadd.s32 %s21, %s22
      %p282 = scmp.lt.s32.totalorder %s281, 1
      %s283 = scalar_select %p282, %s281, 1
      %p284 = scmp.lt.s32.totalorder %s23, 0
      %s285 = scalar_select %p284, %s23, 0
      %s286 = sadd.s32 %s285, %s283
      %s287 = smul.addr %s286, 2
      %s288 = scalar_lea.vmem %s4, %s287
      %s289 = smul.u32 16, %s22
      %p290 = scmp.lt.s32.totalorder %s21, 1
      %s291 = scalar_select %p290, %s21, 1
      %p292 = scmp.lt.s32.totalorder %s289, 31
      %s293 = scalar_select %p292, %s289, 31
      %s294 = smul.addr %s293, 3
      %s295 = smul.addr %s291, 96
      %s296 = sadd.s32 %s294, %s295
      %s297 = smul.addr %s296, 4
      %s298 = scalar_lea.vmem %s0, %s297
      %s299 = smul.u32 16, %s22
      %s300 = sadd.s32 %s22, 1
      %s301 = smul.u32 16, %s300
      %p302 = scmp.lt.s32.totalorder %s21, 1
      %s303 = scalar_select %p302, %s21, 1
      %p304 = scmp.lt.s32.totalorder %s301, 31
      %s305 = scalar_select %p304, %s301, 31
      %s306 = smul.addr %s305, 3
      %s307 = smul.addr %s303, 96
      %s308 = sadd.s32 %s306, %s307
      %s309 = smul.addr %s308, 4
      %s310 = scalar_lea.vmem %s1, %s309
      %s311 = sadd.s32 %s22, 1
      %s312 = smul.u32 16, %s311
      %p313 = scmp.lt.s32.totalorder %s23, 0
      %s314 = scalar_select %p313, %s23, 0
      %s315 = smul.addr %s314, 4
      %s316 = scalar_lea.vmem %s2, %s315
      %s317 = sadd.s32 %s21, %s22
      %s318 = smul.u32 32, %s317
      %p319 = scmp.lt.s32.totalorder %s318, 63
      %s320 = scalar_select %p319, %s318, 63
      %p321 = scmp.lt.s32.totalorder %s23, 0
      %s322 = scalar_select %p321, %s23, 0
      %s323 = sadd.s32 %s322, %s320
      %s324 = smul.addr %s323, 4
      %s325 = scalar_lea.vmem %s3, %s324
      %s326 = sadd.s32 %s21, %s22
      %s327 = smul.u32 32, %s326
      %s328 = sadd.s32 %s21, %s22
      %p329 = scmp.lt.s32.totalorder %s328, 1
      %s330 = scalar_select %p329, %s328, 1
      %p331 = scmp.lt.s32.totalorder %s23, 0
      %s332 = scalar_select %p331, %s23, 0
      %s333 = sadd.s32 %s332, %s330
      %s334 = smul.addr %s333, 2
      %s335 = scalar_lea.vmem %s4, %s334
      %s336 = sadd.s32 %s21, %s22
      %v338 = vld [vmem:[%s298] sm:$0xf]
      %v339 = vld [vmem:[%s298 + $0x4] sm:$0xf]
      %v340 = vld [vmem:[%s298 + $0x8] sm:$0x1]
      %s341 = scalar_lea.vmem %s298, 12
      %v342 = vld [vmem:[%s341] sm:$0xf]
      %v343 = vld [vmem:[%s341 + $0x4] sm:$0xf]
      %v344 = vld [vmem:[%s341 + $0x8] sm:$0x1]
      %s345 = scalar_lea.vmem %s298, 24
      %v346 = vld [vmem:[%s345] sm:$0xf]
      %v347 = vld [vmem:[%s345 + $0x4] sm:$0xf]
      %v348 = vld [vmem:[%s345 + $0x8] sm:$0x1]
      %v351 = vunpack.c.l.b16 %v338
      %v352 = vunpack.c.l.b16 %v339
      %v353 = vpack.c.b16 %v352, %v351
      %v355 = vunpack.c.l.b16 %v340
      %v356 = vpack.c.b16 %v355, %v355
      %vm357 = vsmask.f32 7424
      %v359 = vshrl.u32 %v353, 16
      %v361 = vshll.u32 %v353, 16
      %v363 = vrot.slane %v361, 1
      %v364 = vor.u32 %v359, %v363
      %v366 = vshll.u32 %v356, 16
      %v368 = vrot.slane %v366, 1
      %v369 = vsel %vm357, %v364, %v368
      %370 = vrot.lane.b32.xlu0 %v369, 4
      %v371 = vpop.permute.xlu0 %370
      %vm372 = vcmask 1046528
      %v373 = vrot.slane %v353, 1
      %v374 = vrot.slane %v356, 1
      %v375 = vsel %vm372, %v373, %v374
      %376 = vrot.lane.b32.xlu0 %v375, 8
      %v377 = vpop.permute.xlu0 %376
      %v380 = vunpack.c.l.b16 %v342
      %v381 = vunpack.c.l.b16 %v343
      %v382 = vpack.c.b16 %v381, %v380
      %383 = vrot.lane.b32.xlu0 %v382, 12
      %v384 = vpop.permute.xlu0 %383
      %v386 = vunpack.c.l.b16 %v344
      %v387 = vpack.c.b16 %v386, %v386
      %v389 = vshrl.u32 %v382, 16
      %v391 = vshll.u32 %v382, 16
      %v393 = vrot.slane %v391, 1
      %v394 = vor.u32 %v389, %v393
      %v396 = vshll.u32 %v387, 16
      %v398 = vrot.slane %v396, 1
      %v399 = vsel %vm357, %v394, %v398
      %400 = vrot.lane.b32.xlu0 %v399, 16
      %v401 = vpop.permute.xlu0 %400
      %v402 = vrot.slane %v382, 1
      %v403 = vrot.slane %v387, 1
      %v404 = vsel %vm372, %v402, %v403
      %405 = vrot.lane.b32.xlu0 %v404, 20
      %v406 = vpop.permute.xlu0 %405
      %v409 = vunpack.c.l.b16 %v346
      %v410 = vunpack.c.l.b16 %v347
      %v411 = vpack.c.b16 %v410, %v409
      %412 = vrot.lane.b32.xlu0 %v411, 24
      %v413 = vpop.permute.xlu0 %412
      %v415 = vunpack.c.l.b16 %v348
      %v416 = vpack.c.b16 %v415, %v415
      %v418 = vshrl.u32 %v411, 16
      %v420 = vshll.u32 %v411, 16
      %v422 = vrot.slane %v420, 1
      %v423 = vor.u32 %v418, %v422
      %v425 = vshll.u32 %v416, 16
      %v427 = vrot.slane %v425, 1
      %v428 = vsel %vm357, %v423, %v427
      %429 = vrot.lane.b32.xlu0 %v428, 28
      %v430 = vpop.permute.xlu0 %429
      %v431 = vrot.slane %v411, 1
      %v432 = vrot.slane %v416, 1
      %v433 = vsel %vm372, %v431, %v432
      %434 = vrot.lane.b32.xlu0 %v433, 32
      %v435 = vpop.permute.xlu0 %434
      %vm436 = vcmask 31744
      %v438 = vsel %vm436, %v353, %v371
      %vm439 = vcmask 64512
      %v441 = vsel %vm439, %v438, %v377
      %vm442 = vcmask 97280
      %v444 = vsel %vm442, %v441, %v384
      %vm445 = vcmask 130048
      %v447 = vsel %vm445, %v444, %v401
      %vm448 = vcmask 162816
      %v450 = vsel %vm448, %v447, %v406
      %vm451 = vcmask 195584
      %v453 = vsel %vm451, %v450, %v413
      %vm454 = vcmask 228352
      %v456 = vsel %vm454, %v453, %v430
      %vm457 = vcmask 261120
      %v459 = vsel %vm457, %v456, %v435
      %s460 = scalar_lea.vmem %s298, 36
      %v461 = vld [vmem:[%s460] sm:$0xf]
      %v462 = vld [vmem:[%s460 + $0x4] sm:$0xf]
      %v463 = vld [vmem:[%s460 + $0x8] sm:$0x1]
      %464 = vrot.lane.b32.xlu0 %v399, 4
      %v465 = vpop.permute.xlu0 %464
      %466 = vrot.lane.b32.xlu0 %v404, 8
      %v467 = vpop.permute.xlu0 %466
      %468 = vrot.lane.b32.xlu0 %v411, 12
      %v469 = vpop.permute.xlu0 %468
      %470 = vrot.lane.b32.xlu0 %v428, 16
      %v471 = vpop.permute.xlu0 %470
      %472 = vrot.lane.b32.xlu0 %v433, 20
      %v473 = vpop.permute.xlu0 %472
      %v476 = vunpack.c.l.b16 %v461
      %v477 = vunpack.c.l.b16 %v462
      %v478 = vpack.c.b16 %v477, %v476
      %479 = vrot.lane.b32.xlu0 %v478, 24
      %v480 = vpop.permute.xlu0 %479
      %v482 = vunpack.c.l.b16 %v463
      %v483 = vpack.c.b16 %v482, %v482
      %v485 = vshrl.u32 %v478, 16
      %v487 = vshll.u32 %v478, 16
      %v489 = vrot.slane %v487, 1
      %v490 = vor.u32 %v485, %v489
      %v492 = vshll.u32 %v483, 16
      %v494 = vrot.slane %v492, 1
      %v495 = vsel %vm357, %v490, %v494
      %496 = vrot.lane.b32.xlu0 %v495, 28
      %v497 = vpop.permute.xlu0 %496
      %v498 = vrot.slane %v478, 1
      %v499 = vrot.slane %v483, 1
      %v500 = vsel %vm372, %v498, %v499
      %501 = vrot.lane.b32.xlu0 %v500, 32
      %v502 = vpop.permute.xlu0 %501
      %v504 = vsel %vm436, %v382, %v465
      %v506 = vsel %vm439, %v504, %v467
      %v508 = vsel %vm442, %v506, %v469
      %v510 = vsel %vm445, %v508, %v471
      %v512 = vsel %vm448, %v510, %v473
      %v514 = vsel %vm451, %v512, %v480
      %v516 = vsel %vm454, %v514, %v497
      %v518 = vsel %vm457, %v516, %v502
      %s519 = scalar_lea.vmem %s298, 48
      %v520 = vld [vmem:[%s519] sm:$0xf]
      %v521 = vld [vmem:[%s519 + $0x4] sm:$0xf]
      %v522 = vld [vmem:[%s519 + $0x8] sm:$0x1]
      %523 = vrot.lane.b32.xlu0 %v428, 4
      %v524 = vpop.permute.xlu0 %523
      %525 = vrot.lane.b32.xlu0 %v433, 8
      %v526 = vpop.permute.xlu0 %525
      %527 = vrot.lane.b32.xlu0 %v478, 12
      %v528 = vpop.permute.xlu0 %527
      %529 = vrot.lane.b32.xlu0 %v495, 16
      %v530 = vpop.permute.xlu0 %529
      %531 = vrot.lane.b32.xlu0 %v500, 20
      %v532 = vpop.permute.xlu0 %531
      %v535 = vunpack.c.l.b16 %v520
      %v536 = vunpack.c.l.b16 %v521
      %v537 = vpack.c.b16 %v536, %v535
      %538 = vrot.lane.b32.xlu0 %v537, 24
      %v539 = vpop.permute.xlu0 %538
      %v541 = vunpack.c.l.b16 %v522
      %v542 = vpack.c.b16 %v541, %v541
      %v544 = vshrl.u32 %v537, 16
      %v546 = vshll.u32 %v537, 16
      %v548 = vrot.slane %v546, 1
      %v549 = vor.u32 %v544, %v548
      %v551 = vshll.u32 %v542, 16
      %v553 = vrot.slane %v551, 1
      %v554 = vsel %vm357, %v549, %v553
      %555 = vrot.lane.b32.xlu0 %v554, 28
      %v556 = vpop.permute.xlu0 %555
      %v557 = vrot.slane %v537, 1
      %v558 = vrot.slane %v542, 1
      %v559 = vsel %vm372, %v557, %v558
      %560 = vrot.lane.b32.xlu0 %v559, 32
      %v561 = vpop.permute.xlu0 %560
      %v563 = vsel %vm436, %v411, %v524
      %v565 = vsel %vm439, %v563, %v526
      %v567 = vsel %vm442, %v565, %v528
      %v569 = vsel %vm445, %v567, %v530
      %v571 = vsel %vm448, %v569, %v532
      %v573 = vsel %vm451, %v571, %v539
      %v575 = vsel %vm454, %v573, %v556
      %v577 = vsel %vm457, %v575, %v561
      %s578 = scalar_lea.vmem %s298, 60
      %v579 = vld [vmem:[%s578] sm:$0xf]
      %v580 = vld [vmem:[%s578 + $0x4] sm:$0xf]
      %v581 = vld [vmem:[%s578 + $0x8] sm:$0x1]
      %582 = vrot.lane.b32.xlu0 %v495, 4
      %v583 = vpop.permute.xlu0 %582
      %584 = vrot.lane.b32.xlu0 %v500, 8
      %v585 = vpop.permute.xlu0 %584
      %586 = vrot.lane.b32.xlu0 %v537, 12
      %v587 = vpop.permute.xlu0 %586
      %588 = vrot.lane.b32.xlu0 %v554, 16
      %v589 = vpop.permute.xlu0 %588
      %590 = vrot.lane.b32.xlu0 %v559, 20
      %v591 = vpop.permute.xlu0 %590
      %v594 = vunpack.c.l.b16 %v579
      %v595 = vunpack.c.l.b16 %v580
      %v596 = vpack.c.b16 %v595, %v594
      %597 = vrot.lane.b32.xlu0 %v596, 24
      %v598 = vpop.permute.xlu0 %597
      %v600 = vunpack.c.l.b16 %v581
      %v601 = vpack.c.b16 %v600, %v600
      %v603 = vshrl.u32 %v596, 16
      %v605 = vshll.u32 %v596, 16
      %v607 = vrot.slane %v605, 1
      %v608 = vor.u32 %v603, %v607
      %v610 = vshll.u32 %v601, 16
      %v612 = vrot.slane %v610, 1
      %v613 = vsel %vm357, %v608, %v612
      %614 = vrot.lane.b32.xlu0 %v613, 28
      %v615 = vpop.permute.xlu0 %614
      %v616 = vrot.slane %v596, 1
      %v617 = vrot.slane %v601, 1
      %v618 = vsel %vm372, %v616, %v617
      %619 = vrot.lane.b32.xlu0 %v618, 32
      %v620 = vpop.permute.xlu0 %619
      %v622 = vsel %vm436, %v478, %v583
      %v624 = vsel %vm439, %v622, %v585
      %v626 = vsel %vm442, %v624, %v587
      %v628 = vsel %vm445, %v626, %v589
      %v630 = vsel %vm448, %v628, %v591
      %v632 = vsel %vm451, %v630, %v598
      %v634 = vsel %vm454, %v632, %v615
      %v636 = vsel %vm457, %v634, %v620
      %s637 = scalar_lea.vmem %s298, 72
      %v638 = vld [vmem:[%s637] sm:$0xf]
      %v639 = vld [vmem:[%s637 + $0x4] sm:$0xf]
      %v640 = vld [vmem:[%s637 + $0x8] sm:$0x1]
      %641 = vrot.lane.b32.xlu0 %v554, 4
      %v642 = vpop.permute.xlu0 %641
      %643 = vrot.lane.b32.xlu0 %v559, 8
      %v644 = vpop.permute.xlu0 %643
      %645 = vrot.lane.b32.xlu0 %v596, 12
      %v646 = vpop.permute.xlu0 %645
      %647 = vrot.lane.b32.xlu0 %v613, 16
      %v648 = vpop.permute.xlu0 %647
      %649 = vrot.lane.b32.xlu0 %v618, 20
      %v650 = vpop.permute.xlu0 %649
      %v653 = vunpack.c.l.b16 %v638
      %v654 = vunpack.c.l.b16 %v639
      %v655 = vpack.c.b16 %v654, %v653
      %656 = vrot.lane.b32.xlu0 %v655, 24
      %v657 = vpop.permute.xlu0 %656
      %v659 = vunpack.c.l.b16 %v640
      %v660 = vpack.c.b16 %v659, %v659
      %v662 = vshrl.u32 %v655, 16
      %v664 = vshll.u32 %v655, 16
      %v666 = vrot.slane %v664, 1
      %v667 = vor.u32 %v662, %v666
      %v669 = vshll.u32 %v660, 16
      %v671 = vrot.slane %v669, 1
      %v672 = vsel %vm357, %v667, %v671
      %673 = vrot.lane.b32.xlu0 %v672, 28
      %v674 = vpop.permute.xlu0 %673
      %v675 = vrot.slane %v655, 1
      %v676 = vrot.slane %v660, 1
      %v677 = vsel %vm372, %v675, %v676
      %678 = vrot.lane.b32.xlu0 %v677, 32
      %v679 = vpop.permute.xlu0 %678
      %v681 = vsel %vm436, %v537, %v642
      %v683 = vsel %vm439, %v681, %v644
      %v685 = vsel %vm442, %v683, %v646
      %v687 = vsel %vm445, %v685, %v648
      %v689 = vsel %vm448, %v687, %v650
      %v691 = vsel %vm451, %v689, %v657
      %v693 = vsel %vm454, %v691, %v674
      %v695 = vsel %vm457, %v693, %v679
      %s696 = scalar_lea.vmem %s298, 84
      %v697 = vld [vmem:[%s696] sm:$0xf]
      %v698 = vld [vmem:[%s696 + $0x4] sm:$0xf]
      %v699 = vld [vmem:[%s696 + $0x8] sm:$0x1]
      %700 = vrot.lane.b32.xlu0 %v613, 4
      %v701 = vpop.permute.xlu0 %700
      %702 = vrot.lane.b32.xlu0 %v618, 8
      %v703 = vpop.permute.xlu0 %702
      %704 = vrot.lane.b32.xlu0 %v655, 12
      %v705 = vpop.permute.xlu0 %704
      %706 = vrot.lane.b32.xlu0 %v672, 16
      %v707 = vpop.permute.xlu0 %706
      %708 = vrot.lane.b32.xlu0 %v677, 20
      %v709 = vpop.permute.xlu0 %708
      %v712 = vunpack.c.l.b16 %v697
      %v713 = vunpack.c.l.b16 %v698
      %v714 = vpack.c.b16 %v713, %v712
      %715 = vrot.lane.b32.xlu0 %v714, 24
      %v716 = vpop.permute.xlu0 %715
      %v718 = vunpack.c.l.b16 %v699
      %v719 = vpack.c.b16 %v718, %v718
      %v721 = vshrl.u32 %v714, 16
      %v723 = vshll.u32 %v714, 16
      %v725 = vrot.slane %v723, 1
      %v726 = vor.u32 %v721, %v725
      %v728 = vshll.u32 %v719, 16
      %v730 = vrot.slane %v728, 1
      %v731 = vsel %vm357, %v726, %v730
      %732 = vrot.lane.b32.xlu0 %v731, 28
      %v733 = vpop.permute.xlu0 %732
      %v734 = vrot.slane %v714, 1
      %v735 = vrot.slane %v719, 1
      %v736 = vsel %vm372, %v734, %v735
      %737 = vrot.lane.b32.xlu0 %v736, 32
      %v738 = vpop.permute.xlu0 %737
      %v740 = vsel %vm436, %v596, %v701
      %v742 = vsel %vm439, %v740, %v703
      %v744 = vsel %vm442, %v742, %v705
      %v746 = vsel %vm445, %v744, %v707
      %v748 = vsel %vm448, %v746, %v709
      %v750 = vsel %vm451, %v748, %v716
      %v752 = vsel %vm454, %v750, %v733
      %v754 = vsel %vm457, %v752, %v738
      %s755 = scalar_lea.vmem %s298, 96
      %v756 = vld [vmem:[%s755] sm:$0xf]
      %v757 = vld [vmem:[%s755 + $0x4] sm:$0xf]
      %v758 = vld [vmem:[%s755 + $0x8] sm:$0x1]
      %759 = vrot.lane.b32.xlu0 %v672, 4
      %v760 = vpop.permute.xlu0 %759
      %761 = vrot.lane.b32.xlu0 %v677, 8
      %v762 = vpop.permute.xlu0 %761
      %763 = vrot.lane.b32.xlu0 %v714, 12
      %v764 = vpop.permute.xlu0 %763
      %765 = vrot.lane.b32.xlu0 %v731, 16
      %v766 = vpop.permute.xlu0 %765
      %767 = vrot.lane.b32.xlu0 %v736, 20
      %v768 = vpop.permute.xlu0 %767
      %v771 = vunpack.c.l.b16 %v756
      %v772 = vunpack.c.l.b16 %v757
      %v773 = vpack.c.b16 %v772, %v771
      %774 = vrot.lane.b32.xlu0 %v773, 24
      %v775 = vpop.permute.xlu0 %774
      %v777 = vunpack.c.l.b16 %v758
      %v778 = vpack.c.b16 %v777, %v777
      %v780 = vshrl.u32 %v773, 16
      %v782 = vshll.u32 %v773, 16
      %v784 = vrot.slane %v782, 1
      %v785 = vor.u32 %v780, %v784
      %v787 = vshll.u32 %v778, 16
      %v789 = vrot.slane %v787, 1
      %v790 = vsel %vm357, %v785, %v789
      %791 = vrot.lane.b32.xlu0 %v790, 28
      %v792 = vpop.permute.xlu0 %791
      %v793 = vrot.slane %v773, 1
      %v794 = vrot.slane %v778, 1
      %v795 = vsel %vm372, %v793, %v794
      %796 = vrot.lane.b32.xlu0 %v795, 32
      %v797 = vpop.permute.xlu0 %796
      %v799 = vsel %vm436, %v655, %v760
      %v801 = vsel %vm439, %v799, %v762
      %v803 = vsel %vm442, %v801, %v764
      %v805 = vsel %vm445, %v803, %v766
      %v807 = vsel %vm448, %v805, %v768
      %v809 = vsel %vm451, %v807, %v775
      %v811 = vsel %vm454, %v809, %v792
      %v813 = vsel %vm457, %v811, %v797
      %s814 = scalar_lea.vmem %s298, 108
      %v815 = vld [vmem:[%s814] sm:$0xf]
      %v816 = vld [vmem:[%s814 + $0x4] sm:$0xf]
      %v817 = vld [vmem:[%s814 + $0x8] sm:$0x1]
      %818 = vrot.lane.b32.xlu0 %v731, 4
      %v819 = vpop.permute.xlu0 %818
      %820 = vrot.lane.b32.xlu0 %v736, 8
      %v821 = vpop.permute.xlu0 %820
      %822 = vrot.lane.b32.xlu0 %v773, 12
      %v823 = vpop.permute.xlu0 %822
      %824 = vrot.lane.b32.xlu0 %v790, 16
      %v825 = vpop.permute.xlu0 %824
      %826 = vrot.lane.b32.xlu0 %v795, 20
      %v827 = vpop.permute.xlu0 %826
      %v830 = vunpack.c.l.b16 %v815
      %v831 = vunpack.c.l.b16 %v816
      %v832 = vpack.c.b16 %v831, %v830
      %833 = vrot.lane.b32.xlu0 %v832, 24
      %v834 = vpop.permute.xlu0 %833
      %v836 = vunpack.c.l.b16 %v817
      %v837 = vpack.c.b16 %v836, %v836
      %v839 = vshrl.u32 %v832, 16
      %v841 = vshll.u32 %v832, 16
      %v843 = vrot.slane %v841, 1
      %v844 = vor.u32 %v839, %v843
      %v846 = vshll.u32 %v837, 16
      %v848 = vrot.slane %v846, 1
      %v849 = vsel %vm357, %v844, %v848
      %850 = vrot.lane.b32.xlu0 %v849, 28
      %v851 = vpop.permute.xlu0 %850
      %v852 = vrot.slane %v832, 1
      %v853 = vrot.slane %v837, 1
      %v854 = vsel %vm372, %v852, %v853
      %855 = vrot.lane.b32.xlu0 %v854, 32
      %v856 = vpop.permute.xlu0 %855
      %v858 = vsel %vm436, %v714, %v819
      %v860 = vsel %vm439, %v858, %v821
      %v862 = vsel %vm442, %v860, %v823
      %v864 = vsel %vm445, %v862, %v825
      %v866 = vsel %vm448, %v864, %v827
      %v868 = vsel %vm451, %v866, %v834
      %v870 = vsel %vm454, %v868, %v851
      %v872 = vsel %vm457, %v870, %v856
      %s873 = scalar_lea.vmem %s298, 120
      %v874 = vld [vmem:[%s873] sm:$0xf]
      %v875 = vld [vmem:[%s873 + $0x4] sm:$0xf]
      %v876 = vld [vmem:[%s873 + $0x8] sm:$0x1]
      %877 = vrot.lane.b32.xlu0 %v790, 4
      %v878 = vpop.permute.xlu0 %877
      %879 = vrot.lane.b32.xlu0 %v795, 8
      %v880 = vpop.permute.xlu0 %879
      %881 = vrot.lane.b32.xlu0 %v832, 12
      %v882 = vpop.permute.xlu0 %881
      %883 = vrot.lane.b32.xlu0 %v849, 16
      %v884 = vpop.permute.xlu0 %883
      %885 = vrot.lane.b32.xlu0 %v854, 20
      %v886 = vpop.permute.xlu0 %885
      %v889 = vunpack.c.l.b16 %v874
      %v890 = vunpack.c.l.b16 %v875
      %v891 = vpack.c.b16 %v890, %v889
      %892 = vrot.lane.b32.xlu0 %v891, 24
      %v893 = vpop.permute.xlu0 %892
      %v895 = vunpack.c.l.b16 %v876
      %v896 = vpack.c.b16 %v895, %v895
      %v898 = vshrl.u32 %v891, 16
      %v900 = vshll.u32 %v891, 16
      %v902 = vrot.slane %v900, 1
      %v903 = vor.u32 %v898, %v902
      %v905 = vshll.u32 %v896, 16
      %v907 = vrot.slane %v905, 1
      %v908 = vsel %vm357, %v903, %v907
      %909 = vrot.lane.b32.xlu0 %v908, 28
      %v910 = vpop.permute.xlu0 %909
      %v911 = vrot.slane %v891, 1
      %v912 = vrot.slane %v896, 1
      %v913 = vsel %vm372, %v911, %v912
      %914 = vrot.lane.b32.xlu0 %v913, 32
      %v915 = vpop.permute.xlu0 %914
      %v917 = vsel %vm436, %v773, %v878
      %v919 = vsel %vm439, %v917, %v880
      %v921 = vsel %vm442, %v919, %v882
      %v923 = vsel %vm445, %v921, %v884
      %v925 = vsel %vm448, %v923, %v886
      %v927 = vsel %vm451, %v925, %v893
      %v929 = vsel %vm454, %v927, %v910
      %v931 = vsel %vm457, %v929, %v915
      %s932 = scalar_lea.vmem %s298, 132
      %v933 = vld [vmem:[%s932] sm:$0xf]
      %v934 = vld [vmem:[%s932 + $0x4] sm:$0xf]
      %v935 = vld [vmem:[%s932 + $0x8] sm:$0x1]
      %936 = vrot.lane.b32.xlu0 %v849, 4
      %v937 = vpop.permute.xlu0 %936
      %938 = vrot.lane.b32.xlu0 %v854, 8
      %v939 = vpop.permute.xlu0 %938
      %940 = vrot.lane.b32.xlu0 %v891, 12
      %v941 = vpop.permute.xlu0 %940
      %942 = vrot.lane.b32.xlu0 %v908, 16
      %v943 = vpop.permute.xlu0 %942
      %944 = vrot.lane.b32.xlu0 %v913, 20
      %v945 = vpop.permute.xlu0 %944
      %v948 = vunpack.c.l.b16 %v933
      %v949 = vunpack.c.l.b16 %v934
      %v950 = vpack.c.b16 %v949, %v948
      %951 = vrot.lane.b32.xlu0 %v950, 24
      %v952 = vpop.permute.xlu0 %951
      %v954 = vunpack.c.l.b16 %v935
      %v955 = vpack.c.b16 %v954, %v954
      %v957 = vshrl.u32 %v950, 16
      %v959 = vshll.u32 %v950, 16
      %v961 = vrot.slane %v959, 1
      %v962 = vor.u32 %v957, %v961
      %v964 = vshll.u32 %v955, 16
      %v966 = vrot.slane %v964, 1
      %v967 = vsel %vm357, %v962, %v966
      %968 = vrot.lane.b32.xlu0 %v967, 28
      %v969 = vpop.permute.xlu0 %968
      %v970 = vrot.slane %v950, 1
      %v971 = vrot.slane %v955, 1
      %v972 = vsel %vm372, %v970, %v971
      %973 = vrot.lane.b32.xlu0 %v972, 32
      %v974 = vpop.permute.xlu0 %973
      %v976 = vsel %vm436, %v832, %v937
      %v978 = vsel %vm439, %v976, %v939
      %v980 = vsel %vm442, %v978, %v941
      %v982 = vsel %vm445, %v980, %v943
      %v984 = vsel %vm448, %v982, %v945
      %v986 = vsel %vm451, %v984, %v952
      %v988 = vsel %vm454, %v986, %v969
      %v990 = vsel %vm457, %v988, %v974
      %s991 = scalar_lea.vmem %s298, 144
      %v992 = vld [vmem:[%s991] sm:$0xf]
      %v993 = vld [vmem:[%s991 + $0x4] sm:$0xf]
      %v994 = vld [vmem:[%s991 + $0x8] sm:$0x1]
      %995 = vrot.lane.b32.xlu0 %v908, 4
      %v996 = vpop.permute.xlu0 %995
      %997 = vrot.lane.b32.xlu0 %v913, 8
      %v998 = vpop.permute.xlu0 %997
      %999 = vrot.lane.b32.xlu0 %v950, 12
      %v1000 = vpop.permute.xlu0 %999
      %1001 = vrot.lane.b32.xlu0 %v967, 16
      %v1002 = vpop.permute.xlu0 %1001
      %1003 = vrot.lane.b32.xlu0 %v972, 20
      %v1004 = vpop.permute.xlu0 %1003
      %v1007 = vunpack.c.l.b16 %v992
      %v1008 = vunpack.c.l.b16 %v993
      %v1009 = vpack.c.b16 %v1008, %v1007
      %1010 = vrot.lane.b32.xlu0 %v1009, 24
      %v1011 = vpop.permute.xlu0 %1010
      %v1013 = vunpack.c.l.b16 %v994
      %v1014 = vpack.c.b16 %v1013, %v1013
      %v1016 = vshrl.u32 %v1009, 16
      %v1018 = vshll.u32 %v1009, 16
      %v1020 = vrot.slane %v1018, 1
      %v1021 = vor.u32 %v1016, %v1020
      %v1023 = vshll.u32 %v1014, 16
      %v1025 = vrot.slane %v1023, 1
      %v1026 = vsel %vm357, %v1021, %v1025
      %1027 = vrot.lane.b32.xlu0 %v1026, 28
      %v1028 = vpop.permute.xlu0 %1027
      %v1029 = vrot.slane %v1009, 1
      %v1030 = vrot.slane %v1014, 1
      %v1031 = vsel %vm372, %v1029, %v1030
      %1032 = vrot.lane.b32.xlu0 %v1031, 32
      %v1033 = vpop.permute.xlu0 %1032
      %v1035 = vsel %vm436, %v891, %v996
      %v1037 = vsel %vm439, %v1035, %v998
      %v1039 = vsel %vm442, %v1037, %v1000
      %v1041 = vsel %vm445, %v1039, %v1002
      %v1043 = vsel %vm448, %v1041, %v1004
      %v1045 = vsel %vm451, %v1043, %v1011
      %v1047 = vsel %vm454, %v1045, %v1028
      %v1049 = vsel %vm457, %v1047, %v1033
      %s1050 = scalar_lea.vmem %s298, 156
      %v1051 = vld [vmem:[%s1050] sm:$0xf]
      %v1052 = vld [vmem:[%s1050 + $0x4] sm:$0xf]
      %v1053 = vld [vmem:[%s1050 + $0x8] sm:$0x1]
      %1054 = vrot.lane.b32.xlu0 %v967, 4
      %v1055 = vpop.permute.xlu0 %1054
      %1056 = vrot.lane.b32.xlu0 %v972, 8
      %v1057 = vpop.permute.xlu0 %1056
      %1058 = vrot.lane.b32.xlu0 %v1009, 12
      %v1059 = vpop.permute.xlu0 %1058
      %1060 = vrot.lane.b32.xlu0 %v1026, 16
      %v1061 = vpop.permute.xlu0 %1060
      %1062 = vrot.lane.b32.xlu0 %v1031, 20
      %v1063 = vpop.permute.xlu0 %1062
      %v1066 = vunpack.c.l.b16 %v1051
      %v1067 = vunpack.c.l.b16 %v1052
      %v1068 = vpack.c.b16 %v1067, %v1066
      %1069 = vrot.lane.b32.xlu0 %v1068, 24
      %v1070 = vpop.permute.xlu0 %1069
      %v1072 = vunpack.c.l.b16 %v1053
      %v1073 = vpack.c.b16 %v1072, %v1072
      %v1075 = vshrl.u32 %v1068, 16
      %v1077 = vshll.u32 %v1068, 16
      %v1079 = vrot.slane %v1077, 1
      %v1080 = vor.u32 %v1075, %v1079
      %v1082 = vshll.u32 %v1073, 16
      %v1084 = vrot.slane %v1082, 1
      %v1085 = vsel %vm357, %v1080, %v1084
      %1086 = vrot.lane.b32.xlu0 %v1085, 28
      %v1087 = vpop.permute.xlu0 %1086
      %v1088 = vrot.slane %v1068, 1
      %v1089 = vrot.slane %v1073, 1
      %v1090 = vsel %vm372, %v1088, %v1089
      %1091 = vrot.lane.b32.xlu0 %v1090, 32
      %v1092 = vpop.permute.xlu0 %1091
      %v1094 = vsel %vm436, %v950, %v1055
      %v1096 = vsel %vm439, %v1094, %v1057
      %v1098 = vsel %vm442, %v1096, %v1059
      %v1100 = vsel %vm445, %v1098, %v1061
      %v1102 = vsel %vm448, %v1100, %v1063
      %v1104 = vsel %vm451, %v1102, %v1070
      %v1106 = vsel %vm454, %v1104, %v1087
      %v1108 = vsel %vm457, %v1106, %v1092
      %s1109 = scalar_lea.vmem %s298, 168
      %v1110 = vld [vmem:[%s1109] sm:$0xf]
      %v1111 = vld [vmem:[%s1109 + $0x4] sm:$0xf]
      %v1112 = vld [vmem:[%s1109 + $0x8] sm:$0x1]
      %1113 = vrot.lane.b32.xlu0 %v1026, 4
      %v1114 = vpop.permute.xlu0 %1113
      %1115 = vrot.lane.b32.xlu0 %v1031, 8
      %v1116 = vpop.permute.xlu0 %1115
      %1117 = vrot.lane.b32.xlu0 %v1068, 12
      %v1118 = vpop.permute.xlu0 %1117
      %1119 = vrot.lane.b32.xlu0 %v1085, 16
      %v1120 = vpop.permute.xlu0 %1119
      %1121 = vrot.lane.b32.xlu0 %v1090, 20
      %v1122 = vpop.permute.xlu0 %1121
      %v1125 = vunpack.c.l.b16 %v1110
      %v1126 = vunpack.c.l.b16 %v1111
      %v1127 = vpack.c.b16 %v1126, %v1125
      %1128 = vrot.lane.b32.xlu0 %v1127, 24
      %v1129 = vpop.permute.xlu0 %1128
      %v1131 = vunpack.c.l.b16 %v1112
      %v1132 = vpack.c.b16 %v1131, %v1131
      %v1134 = vshrl.u32 %v1127, 16
      %v1136 = vshll.u32 %v1127, 16
      %v1138 = vrot.slane %v1136, 1
      %v1139 = vor.u32 %v1134, %v1138
      %v1141 = vshll.u32 %v1132, 16
      %v1143 = vrot.slane %v1141, 1
      %v1144 = vsel %vm357, %v1139, %v1143
      %1145 = vrot.lane.b32.xlu0 %v1144, 28
      %v1146 = vpop.permute.xlu0 %1145
      %v1147 = vrot.slane %v1127, 1
      %v1148 = vrot.slane %v1132, 1
      %v1149 = vsel %vm372, %v1147, %v1148
      %1150 = vrot.lane.b32.xlu0 %v1149, 32
      %v1151 = vpop.permute.xlu0 %1150
      %v1153 = vsel %vm436, %v1009, %v1114
      %v1155 = vsel %vm439, %v1153, %v1116
      %v1157 = vsel %vm442, %v1155, %v1118
      %v1159 = vsel %vm445, %v1157, %v1120
      %v1161 = vsel %vm448, %v1159, %v1122
      %v1163 = vsel %vm451, %v1161, %v1129
      %v1165 = vsel %vm454, %v1163, %v1146
      %v1167 = vsel %vm457, %v1165, %v1151
      %s1168 = scalar_lea.vmem %s298, 180
      %v1169 = vld [vmem:[%s1168] sm:$0xf]
      %v1170 = vld [vmem:[%s1168 + $0x4] sm:$0xf]
      %v1171 = vld [vmem:[%s1168 + $0x8] sm:$0x1]
      %1172 = vrot.lane.b32.xlu0 %v1085, 4
      %v1173 = vpop.permute.xlu0 %1172
      %1174 = vrot.lane.b32.xlu0 %v1090, 8
      %v1175 = vpop.permute.xlu0 %1174
      %1176 = vrot.lane.b32.xlu0 %v1127, 12
      %v1177 = vpop.permute.xlu0 %1176
      %1178 = vrot.lane.b32.xlu0 %v1144, 16
      %v1179 = vpop.permute.xlu0 %1178
      %1180 = vrot.lane.b32.xlu0 %v1149, 20
      %v1181 = vpop.permute.xlu0 %1180
      %v1184 = vunpack.c.l.b16 %v1169
      %v1185 = vunpack.c.l.b16 %v1170
      %v1186 = vpack.c.b16 %v1185, %v1184
      %1187 = vrot.lane.b32.xlu0 %v1186, 24
      %v1188 = vpop.permute.xlu0 %1187
      %v1190 = vunpack.c.l.b16 %v1171
      %v1191 = vpack.c.b16 %v1190, %v1190
      %v1193 = vshrl.u32 %v1186, 16
      %v1195 = vshll.u32 %v1186, 16
      %v1197 = vrot.slane %v1195, 1
      %v1198 = vor.u32 %v1193, %v1197
      %v1200 = vshll.u32 %v1191, 16
      %v1202 = vrot.slane %v1200, 1
      %v1203 = vsel %vm357, %v1198, %v1202
      %1204 = vrot.lane.b32.xlu0 %v1203, 28
      %v1205 = vpop.permute.xlu0 %1204
      %v1206 = vrot.slane %v1186, 1
      %v1207 = vrot.slane %v1191, 1
      %v1208 = vsel %vm372, %v1206, %v1207
      %1209 = vrot.lane.b32.xlu0 %v1208, 32
      %v1210 = vpop.permute.xlu0 %1209
      %v1212 = vsel %vm436, %v1068, %v1173
      %v1214 = vsel %vm439, %v1212, %v1175
      %v1216 = vsel %vm442, %v1214, %v1177
      %v1218 = vsel %vm445, %v1216, %v1179
      %v1220 = vsel %vm448, %v1218, %v1181
      %v1222 = vsel %vm451, %v1220, %v1188
      %v1224 = vsel %vm454, %v1222, %v1205
      %v1226 = vsel %vm457, %v1224, %v1210
      %v1227 = vld [vmem:[%s310] sm:$0xf]
      %v1228 = vld [vmem:[%s310 + $0x4] sm:$0xf]
      %v1229 = vld [vmem:[%s310 + $0x8] sm:$0x1]
      %1230 = vrot.lane.b32.xlu0 %v1144, 4
      %v1231 = vpop.permute.xlu0 %1230
      %1232 = vrot.lane.b32.xlu0 %v1149, 8
      %v1233 = vpop.permute.xlu0 %1232
      %1234 = vrot.lane.b32.xlu0 %v1186, 12
      %v1235 = vpop.permute.xlu0 %1234
      %1236 = vrot.lane.b32.xlu0 %v1203, 16
      %v1237 = vpop.permute.xlu0 %1236
      %1238 = vrot.lane.b32.xlu0 %v1208, 20
      %v1239 = vpop.permute.xlu0 %1238
      %v1242 = vunpack.c.l.b16 %v1227
      %v1243 = vunpack.c.l.b16 %v1228
      %v1244 = vpack.c.b16 %v1243, %v1242
      %1245 = vrot.lane.b32.xlu0 %v1244, 24
      %v1246 = vpop.permute.xlu0 %1245
      %v1248 = vunpack.c.l.b16 %v1229
      %v1249 = vpack.c.b16 %v1248, %v1248
      %v1251 = vshrl.u32 %v1244, 16
      %v1253 = vshll.u32 %v1244, 16
      %v1255 = vrot.slane %v1253, 1
      %v1256 = vor.u32 %v1251, %v1255
      %v1258 = vshll.u32 %v1249, 16
      %v1260 = vrot.slane %v1258, 1
      %v1261 = vsel %vm357, %v1256, %v1260
      %1262 = vrot.lane.b32.xlu0 %v1261, 28
      %v1263 = vpop.permute.xlu0 %1262
      %v1264 = vrot.slane %v1244, 1
      %v1265 = vrot.slane %v1249, 1
      %v1266 = vsel %vm372, %v1264, %v1265
      %1267 = vrot.lane.b32.xlu0 %v1266, 32
      %v1268 = vpop.permute.xlu0 %1267
      %v1270 = vsel %vm436, %v1127, %v1231
      %v1272 = vsel %vm439, %v1270, %v1233
      %v1274 = vsel %vm442, %v1272, %v1235
      %v1276 = vsel %vm445, %v1274, %v1237
      %v1278 = vsel %vm448, %v1276, %v1239
      %v1280 = vsel %vm451, %v1278, %v1246
      %v1282 = vsel %vm454, %v1280, %v1263
      %v1284 = vsel %vm457, %v1282, %v1268
      %s1285 = scalar_lea.vmem %s310, 12
      %v1286 = vld [vmem:[%s1285] sm:$0xf]
      %v1287 = vld [vmem:[%s1285 + $0x4] sm:$0xf]
      %v1288 = vld [vmem:[%s1285 + $0x8] sm:$0x1]
      %1289 = vrot.lane.b32.xlu0 %v1203, 4
      %v1290 = vpop.permute.xlu0 %1289
      %1291 = vrot.lane.b32.xlu0 %v1208, 8
      %v1292 = vpop.permute.xlu0 %1291
      %1293 = vrot.lane.b32.xlu0 %v1244, 12
      %v1294 = vpop.permute.xlu0 %1293
      %1295 = vrot.lane.b32.xlu0 %v1261, 16
      %v1296 = vpop.permute.xlu0 %1295
      %1297 = vrot.lane.b32.xlu0 %v1266, 20
      %v1298 = vpop.permute.xlu0 %1297
      %v1301 = vunpack.c.l.b16 %v1286
      %v1302 = vunpack.c.l.b16 %v1287
      %v1303 = vpack.c.b16 %v1302, %v1301
      %1304 = vrot.lane.b32.xlu0 %v1303, 24
      %v1305 = vpop.permute.xlu0 %1304
      %v1307 = vunpack.c.l.b16 %v1288
      %v1308 = vpack.c.b16 %v1307, %v1307
      %v1310 = vshrl.u32 %v1303, 16
      %v1312 = vshll.u32 %v1303, 16
      %v1314 = vrot.slane %v1312, 1
      %v1315 = vor.u32 %v1310, %v1314
      %v1317 = vshll.u32 %v1308, 16
      %v1319 = vrot.slane %v1317, 1
      %v1320 = vsel %vm357, %v1315, %v1319
      %1321 = vrot.lane.b32.xlu0 %v1320, 28
      %v1322 = vpop.permute.xlu0 %1321
      %v1323 = vrot.slane %v1303, 1
      %v1324 = vrot.slane %v1308, 1
      %v1325 = vsel %vm372, %v1323, %v1324
      %1326 = vrot.lane.b32.xlu0 %v1325, 32
      %v1327 = vpop.permute.xlu0 %1326
      %v1329 = vsel %vm436, %v1186, %v1290
      %v1331 = vsel %vm439, %v1329, %v1292
      %v1333 = vsel %vm442, %v1331, %v1294
      %v1335 = vsel %vm445, %v1333, %v1296
      %v1337 = vsel %vm448, %v1335, %v1298
      %v1339 = vsel %vm451, %v1337, %v1305
      %v1341 = vsel %vm454, %v1339, %v1322
      %v1343 = vsel %vm457, %v1341, %v1327
      %vm1344 = vcmask 293888
      %v1346 = vsel %vm1344, %v459, 0
      %v1347 = vsel %vm1344, %v518, 0
      %v1348 = vsel %vm1344, %v577, 0
      %v1349 = vsel %vm1344, %v636, 0
      %v1350 = vsel %vm1344, %v695, 0
      %v1351 = vsel %vm1344, %v754, 0
      %v1352 = vsel %vm1344, %v813, 0
      %v1353 = vsel %vm1344, %v872, 0
      %v1354 = vsel %vm1344, %v931, 0
      %v1355 = vsel %vm1344, %v990, 0
      %v1356 = vsel %vm1344, %v1049, 0
      %v1357 = vsel %vm1344, %v1108, 0
      %v1358 = vsel %vm1344, %v1167, 0
      %v1359 = vsel %vm1344, %v1226, 0
      %v1360 = vsel %vm1344, %v1284, 0
      %v1361 = vsel %vm1344, %v1343, 0
      %v1362 = vld [vmem:[%s316] sm:$0xf]
      %v1363 = vld [vmem:[%s316 + $0x4] sm:$0xf]
      %v1364 = vld [vmem:[%s316 + $0x8] sm:$0xf]
      %v1365 = vld [vmem:[%s316 + $0xc] sm:$0xf]
      %v1366 = vld [vmem:[%s316 + $0x10] sm:$0xf]
      %v1367 = vld [vmem:[%s316 + $0x14] sm:$0xf]
      %v1374 = vunpack.c.l.b16 %v1362
      %v1375 = vunpack.c.l.b16 %v1363
      %v1376 = vunpack.c.l.b16 %v1364
      %v1377 = vunpack.c.l.b16 %v1365
      %v1378 = vunpack.c.l.b16 %v1366
      %v1379 = vunpack.c.l.b16 %v1367
      %v1380 = vpack.c.b16 %v1375, %v1374
      %v1381 = vpack.c.b16 %v1377, %v1376
      %v1382 = vpack.c.b16 %v1379, %v1378
      %vm1386 = vcmask 392192
      %v1387 = vsel %vm1386, %v1346, 0
      %v1389 = vsel %vm1386, %v1347, 0
      %v1391 = vsel %vm1386, %v1348, 0
      %v1393 = vsel %vm1386, %v1349, 0
      %v1395 = vsel %vm1386, %v1350, 0
      %v1397 = vsel %vm1386, %v1351, 0
      %v1399 = vsel %vm1386, %v1352, 0
      %v1401 = vsel %vm1386, %v1353, 0
      %v1403 = vsel %vm1386, %v1354, 0
      %v1405 = vsel %vm1386, %v1355, 0
      %v1407 = vsel %vm1386, %v1356, 0
      %v1409 = vsel %vm1386, %v1357, 0
      %v1411 = vsel %vm1386, %v1358, 0
      %v1413 = vsel %vm1386, %v1359, 0
      %v1415 = vsel %vm1386, %v1360, 0
      %v1417 = vsel %vm1386, %v1361, 0
      %1419 = vmatprep.subr.bf16.mxu0 0
      %1420 = vmatpush1.bf16.msra.mxu0 0
      %1421 = vmatprep.subr.bf16.mxu0 0
      %1422 = vmatpush1.bf16.msra.mxu0 0
      %1423 = vmatprep.subr.bf16.mxu0 0
      %1424 = vmatpush1.bf16.msra.mxu0 0
      %1425 = vmatprep.subr.bf16.mxu0 0
      %1426 = vmatpush1.bf16.msra.mxu0 0
      %1427 = vmatprep.subr.bf16.mxu0 0
      %1428 = vmatpush1.bf16.msra.mxu0 0
      %1429 = vmatprep.subr.bf16.mxu0 0
      %1430 = vmatpush1.bf16.msra.mxu0 %v1382
      %1431 = vmatprep.subr.bf16.mxu0 0
      %1432 = vmatpush1.bf16.msra.mxu0 %v1381
      %1433 = vmatprep.subr.bf16.mxu0 0
      %1434 = vmatpush1.bf16.msra.mxu0 %v1380
      %1435 = vmatprep.subr.bf16.mxu0 0
      %1436 = vmatpush2.bf16.msra.mxu0 0
      %1437 = vmatprep.subr.bf16.mxu0 0
      %1438 = vmatpush2.bf16.msra.mxu0 0
      %1439 = vmatprep.subr.bf16.mxu0 0
      %1440 = vmatpush2.bf16.msra.mxu0 0
      %1441 = vmatprep.subr.bf16.mxu0 0
      %1442 = vmatpush2.bf16.msra.mxu0 0
      %1443 = vmatprep.subr.bf16.mxu0 0
      %1444 = vmatpush2.bf16.msra.mxu0 0
      %1445 = vmatprep.subr.bf16.mxu0 0
      %1446 = vmatpush2.bf16.msra.mxu0 0
      %1447 = vmatprep.subr.bf16.mxu0 0
      %1448 = vmatpush2.bf16.msra.mxu0 0
      %1449 = vmatprep.subr.bf16.mxu0 0
      %1450 = vmatpush2.bf16.msra.mxu0 0
      %1451 = vmatprep.mubr.bf16.mxu0 0
      %1452 = vmatmul.mubr.bf16.gmra.mxu0 %v1387
      %v1453 = vpop.f32.mrf.mxu0
      %v1454 = vadd.f32 0.0, %v1453
      %v1455 = vpop.f32.mrf.mxu0
      %v1456 = vpop.f32.mrf.mxu0
      %v1457 = vadd.f32 0.0, %v1456
      %v1458 = vpop.f32.mrf.mxu0
      %1459 = vmatprep.mubr.bf16.mxu0 0
      %1460 = vmatmul.mubr.bf16.gmra.mxu0 %v1389
      %v1461 = vpop.f32.mrf.mxu0
      %v1462 = vadd.f32 0.0, %v1461
      %v1463 = vpop.f32.mrf.mxu0
      %v1464 = vpop.f32.mrf.mxu0
      %v1465 = vadd.f32 0.0, %v1464
      %v1466 = vpop.f32.mrf.mxu0
      %1467 = vmatprep.mubr.bf16.mxu0 0
      %1468 = vmatmul.mubr.bf16.gmra.mxu0 %v1391
      %v1469 = vpop.f32.mrf.mxu0
      %v1470 = vadd.f32 0.0, %v1469
      %v1471 = vpop.f32.mrf.mxu0
      %v1472 = vpop.f32.mrf.mxu0
      %v1473 = vadd.f32 0.0, %v1472
      %v1474 = vpop.f32.mrf.mxu0
      %1475 = vmatprep.mubr.bf16.mxu0 0
      %1476 = vmatmul.mubr.bf16.gmra.mxu0 %v1393
      %v1477 = vpop.f32.mrf.mxu0
      %v1478 = vadd.f32 0.0, %v1477
      %v1479 = vpop.f32.mrf.mxu0
      %v1480 = vpop.f32.mrf.mxu0
      %v1481 = vadd.f32 0.0, %v1480
      %v1482 = vpop.f32.mrf.mxu0
      %1483 = vmatprep.mubr.bf16.mxu0 0
      %1484 = vmatmul.mubr.bf16.gmra.mxu0 %v1395
      %v1485 = vpop.f32.mrf.mxu0
      %v1486 = vadd.f32 0.0, %v1485
      %v1487 = vpop.f32.mrf.mxu0
      %v1488 = vpop.f32.mrf.mxu0
      %v1489 = vadd.f32 0.0, %v1488
      %v1490 = vpop.f32.mrf.mxu0
      %1491 = vmatprep.mubr.bf16.mxu0 0
      %1492 = vmatmul.mubr.bf16.gmra.mxu0 %v1397
      %v1493 = vpop.f32.mrf.mxu0
      %v1494 = vadd.f32 0.0, %v1493
      %v1495 = vpop.f32.mrf.mxu0
      %v1496 = vpop.f32.mrf.mxu0
      %v1497 = vadd.f32 0.0, %v1496
      %v1498 = vpop.f32.mrf.mxu0
      %1499 = vmatprep.mubr.bf16.mxu0 0
      %1500 = vmatmul.mubr.bf16.gmra.mxu0 %v1399
      %v1501 = vpop.f32.mrf.mxu0
      %v1502 = vadd.f32 0.0, %v1501
      %v1503 = vpop.f32.mrf.mxu0
      %v1504 = vpop.f32.mrf.mxu0
      %v1505 = vadd.f32 0.0, %v1504
      %v1506 = vpop.f32.mrf.mxu0
      %1507 = vmatprep.mubr.bf16.mxu0 0
      %1508 = vmatmul.mubr.bf16.gmra.mxu0 %v1401
      %v1509 = vpop.f32.mrf.mxu0
      %v1510 = vadd.f32 0.0, %v1509
      %v1511 = vpop.f32.mrf.mxu0
      %v1512 = vpop.f32.mrf.mxu0
      %v1513 = vadd.f32 0.0, %v1512
      %v1514 = vpop.f32.mrf.mxu0
      %1515 = vmatprep.mubr.bf16.mxu0 0
      %1516 = vmatmul.mubr.bf16.gmra.mxu0 %v1403
      %v1517 = vpop.f32.mrf.mxu0
      %v1518 = vadd.f32 0.0, %v1517
      %v1519 = vpop.f32.mrf.mxu0
      %v1520 = vpop.f32.mrf.mxu0
      %v1521 = vadd.f32 0.0, %v1520
      %v1522 = vpop.f32.mrf.mxu0
      %1523 = vmatprep.mubr.bf16.mxu0 0
      %1524 = vmatmul.mubr.bf16.gmra.mxu0 %v1405
      %v1525 = vpop.f32.mrf.mxu0
      %v1526 = vadd.f32 0.0, %v1525
      %v1527 = vpop.f32.mrf.mxu0
      %v1528 = vpop.f32.mrf.mxu0
      %v1529 = vadd.f32 0.0, %v1528
      %v1530 = vpop.f32.mrf.mxu0
      %1531 = vmatprep.mubr.bf16.mxu0 0
      %1532 = vmatmul.mubr.bf16.gmra.mxu0 %v1407
      %v1533 = vpop.f32.mrf.mxu0
      %v1534 = vadd.f32 0.0, %v1533
      %v1535 = vpop.f32.mrf.mxu0
      %v1536 = vpop.f32.mrf.mxu0
      %v1537 = vadd.f32 0.0, %v1536
      %v1538 = vpop.f32.mrf.mxu0
      %1539 = vmatprep.mubr.bf16.mxu0 0
      %1540 = vmatmul.mubr.bf16.gmra.mxu0 %v1409
      %v1541 = vpop.f32.mrf.mxu0
      %v1542 = vadd.f32 0.0, %v1541
      %v1543 = vpop.f32.mrf.mxu0
      %v1544 = vpop.f32.mrf.mxu0
      %v1545 = vadd.f32 0.0, %v1544
      %v1546 = vpop.f32.mrf.mxu0
      %1547 = vmatprep.mubr.bf16.mxu0 0
      %1548 = vmatmul.mubr.bf16.gmra.mxu0 %v1411
      %v1549 = vpop.f32.mrf.mxu0
      %v1550 = vadd.f32 0.0, %v1549
      %v1551 = vpop.f32.mrf.mxu0
      %v1552 = vpop.f32.mrf.mxu0
      %v1553 = vadd.f32 0.0, %v1552
      %v1554 = vpop.f32.mrf.mxu0
      %1555 = vmatprep.mubr.bf16.mxu0 0
      %1556 = vmatmul.mubr.bf16.gmra.mxu0 %v1413
      %v1557 = vpop.f32.mrf.mxu0
      %v1558 = vadd.f32 0.0, %v1557
      %v1559 = vpop.f32.mrf.mxu0
      %v1560 = vpop.f32.mrf.mxu0
      %v1561 = vadd.f32 0.0, %v1560
      %v1562 = vpop.f32.mrf.mxu0
      %1563 = vmatprep.mubr.bf16.mxu0 0
      %1564 = vmatmul.mubr.bf16.gmra.mxu0 %v1415
      %v1565 = vpop.f32.mrf.mxu0
      %v1566 = vadd.f32 0.0, %v1565
      %v1567 = vpop.f32.mrf.mxu0
      %v1568 = vpop.f32.mrf.mxu0
      %v1569 = vadd.f32 0.0, %v1568
      %v1570 = vpop.f32.mrf.mxu0
      %1571 = vmatprep.mubr.bf16.mxu0 0
      %1572 = vmatmul.mubr.bf16.gmra.mxu0 %v1417
      %v1573 = vpop.f32.mrf.mxu0
      %v1574 = vadd.f32 0.0, %v1573
      %v1575 = vpop.f32.mrf.mxu0
      %v1576 = vpop.f32.mrf.mxu0
      %v1577 = vadd.f32 0.0, %v1576
      %v1578 = vpop.f32.mrf.mxu0
      %1579 = vdwg.mxu0
      %v1580 = vpack.c.bf16 %v1457, %v1454
      %v1581 = vpack.c.bf16 %v1465, %v1462
      %v1582 = vpack.c.bf16 %v1473, %v1470
      %v1583 = vpack.c.bf16 %v1481, %v1478
      %v1584 = vpack.c.bf16 %v1489, %v1486
      %v1585 = vpack.c.bf16 %v1497, %v1494
      %v1586 = vpack.c.bf16 %v1505, %v1502
      %v1587 = vpack.c.bf16 %v1513, %v1510
      %v1588 = vpack.c.bf16 %v1521, %v1518
      %v1589 = vpack.c.bf16 %v1529, %v1526
      %v1590 = vpack.c.bf16 %v1537, %v1534
      %v1591 = vpack.c.bf16 %v1545, %v1542
      %v1592 = vpack.c.bf16 %v1553, %v1550
      %v1593 = vpack.c.bf16 %v1561, %v1558
      %v1594 = vpack.c.bf16 %v1569, %v1566
      %v1595 = vpack.c.bf16 %v1577, %v1574
      %v1612 = vunpack.c.l.b16 %v1580
      %v1613 = vunpack.c.h.b16 %v1580
      %v1614 = vunpack.c.l.b16 %v1581
      %v1615 = vunpack.c.h.b16 %v1581
      %v1616 = vunpack.c.l.b16 %v1582
      %v1617 = vunpack.c.h.b16 %v1582
      %v1618 = vunpack.c.l.b16 %v1583
      %v1619 = vunpack.c.h.b16 %v1583
      %v1620 = vunpack.c.l.b16 %v1584
      %v1621 = vunpack.c.h.b16 %v1584
      %v1622 = vunpack.c.l.b16 %v1585
      %v1623 = vunpack.c.h.b16 %v1585
      %v1624 = vunpack.c.l.b16 %v1586
      %v1625 = vunpack.c.h.b16 %v1586
      %v1626 = vunpack.c.l.b16 %v1587
      %v1627 = vunpack.c.h.b16 %v1587
      %v1628 = vunpack.c.l.b16 %v1588
      %v1629 = vunpack.c.h.b16 %v1588
      %v1630 = vunpack.c.l.b16 %v1589
      %v1631 = vunpack.c.h.b16 %v1589
      %v1632 = vunpack.c.l.b16 %v1590
      %v1633 = vunpack.c.h.b16 %v1590
      %v1634 = vunpack.c.l.b16 %v1591
      %v1635 = vunpack.c.h.b16 %v1591
      %v1636 = vunpack.c.l.b16 %v1592
      %v1637 = vunpack.c.h.b16 %v1592
      %v1638 = vunpack.c.l.b16 %v1593
      %v1639 = vunpack.c.h.b16 %v1593
      %v1640 = vunpack.c.l.b16 %v1594
      %v1641 = vunpack.c.h.b16 %v1594
      %v1642 = vunpack.c.l.b16 %v1595
      %v1643 = vunpack.c.h.b16 %v1595
      %v1644 = vpack.c.b16 %v1612, %v1612
      %v1645 = vpack.c.b16 %v1613, %v1613
      %v1646 = vpack.c.b16 %v1614, %v1614
      %v1647 = vpack.c.b16 %v1615, %v1615
      %v1648 = vpack.c.b16 %v1616, %v1616
      %v1649 = vpack.c.b16 %v1617, %v1617
      %v1650 = vpack.c.b16 %v1618, %v1618
      %v1651 = vpack.c.b16 %v1619, %v1619
      %v1652 = vpack.c.b16 %v1620, %v1620
      %v1653 = vpack.c.b16 %v1621, %v1621
      %v1654 = vpack.c.b16 %v1622, %v1622
      %v1655 = vpack.c.b16 %v1623, %v1623
      %v1656 = vpack.c.b16 %v1624, %v1624
      %v1657 = vpack.c.b16 %v1625, %v1625
      %v1658 = vpack.c.b16 %v1626, %v1626
      %v1659 = vpack.c.b16 %v1627, %v1627
      %v1660 = vpack.c.b16 %v1628, %v1628
      %v1661 = vpack.c.b16 %v1629, %v1629
      %v1662 = vpack.c.b16 %v1630, %v1630
      %v1663 = vpack.c.b16 %v1631, %v1631
      %v1664 = vpack.c.b16 %v1632, %v1632
      %v1665 = vpack.c.b16 %v1633, %v1633
      %v1666 = vpack.c.b16 %v1634, %v1634
      %v1667 = vpack.c.b16 %v1635, %v1635
      %v1668 = vpack.c.b16 %v1636, %v1636
      %v1669 = vpack.c.b16 %v1637, %v1637
      %v1670 = vpack.c.b16 %v1638, %v1638
      %v1671 = vpack.c.b16 %v1639, %v1639
      %v1672 = vpack.c.b16 %v1640, %v1640
      %v1673 = vpack.c.b16 %v1641, %v1641
      %v1674 = vpack.c.b16 %v1642, %v1642
      %v1675 = vpack.c.b16 %v1643, %v1643
      %1708 = vst [vmem:[%s325] sm:$0xf] %v1644
      %1709 = vst [vmem:[%s325 + $0x4] sm:$0xf] %v1645
      %1710 = vst [vmem:[%s325 + $0x8] sm:$0xf] %v1646
      %1711 = vst [vmem:[%s325 + $0xc] sm:$0xf] %v1647
      %1712 = vst [vmem:[%s325 + $0x10] sm:$0xf] %v1648
      %1713 = vst [vmem:[%s325 + $0x14] sm:$0xf] %v1649
      %1714 = vst [vmem:[%s325 + $0x18] sm:$0xf] %v1650
      %1715 = vst [vmem:[%s325 + $0x1c] sm:$0xf] %v1651
      %1716 = vst [vmem:[%s325 + $0x20] sm:$0xf] %v1652
      %1717 = vst [vmem:[%s325 + $0x24] sm:$0xf] %v1653
      %1718 = vst [vmem:[%s325 + $0x28] sm:$0xf] %v1654
      %1719 = vst [vmem:[%s325 + $0x2c] sm:$0xf] %v1655
      %1720 = vst [vmem:[%s325 + $0x30] sm:$0xf] %v1656
      %1721 = vst [vmem:[%s325 + $0x34] sm:$0xf] %v1657
      %1722 = vst [vmem:[%s325 + $0x38] sm:$0xf] %v1658
      %1723 = vst [vmem:[%s325 + $0x3c] sm:$0xf] %v1659
      %1724 = vst [vmem:[%s325 + $0x40] sm:$0xf] %v1660
      %1725 = vst [vmem:[%s325 + $0x44] sm:$0xf] %v1661
      %1726 = vst [vmem:[%s325 + $0x48] sm:$0xf] %v1662
      %1727 = vst [vmem:[%s325 + $0x4c] sm:$0xf] %v1663
      %1728 = vst [vmem:[%s325 + $0x50] sm:$0xf] %v1664
      %1729 = vst [vmem:[%s325 + $0x54] sm:$0xf] %v1665
      %1730 = vst [vmem:[%s325 + $0x58] sm:$0xf] %v1666
      %1731 = vst [vmem:[%s325 + $0x5c] sm:$0xf] %v1667
      %1732 = vst [vmem:[%s325 + $0x60] sm:$0xf] %v1668
      %1733 = vst [vmem:[%s325 + $0x64] sm:$0xf] %v1669
      %1734 = vst [vmem:[%s325 + $0x68] sm:$0xf] %v1670
      %1735 = vst [vmem:[%s325 + $0x6c] sm:$0xf] %v1671
      %1736 = vst [vmem:[%s325 + $0x70] sm:$0xf] %v1672
      %1737 = vst [vmem:[%s325 + $0x74] sm:$0xf] %v1673
      %1738 = vst [vmem:[%s325 + $0x78] sm:$0xf] %v1674
      %1739 = vst [vmem:[%s325 + $0x7c] sm:$0xf] %v1675
      %v1740 = vadd.f32 %v1454, %v1457
      %v1741 = vadd.f32 %v1740, %v1462
      %v1742 = vadd.f32 %v1741, %v1465
      %v1743 = vadd.f32 %v1742, %v1470
      %v1744 = vadd.f32 %v1743, %v1473
      %v1745 = vadd.f32 %v1744, %v1478
      %v1746 = vadd.f32 %v1745, %v1481
      %v1747 = vadd.f32 %v1746, %v1486
      %v1748 = vadd.f32 %v1747, %v1489
      %v1749 = vadd.f32 %v1748, %v1494
      %v1750 = vadd.f32 %v1749, %v1497
      %v1751 = vadd.f32 %v1750, %v1502
      %v1752 = vadd.f32 %v1751, %v1505
      %v1753 = vadd.f32 %v1752, %v1510
      %v1754 = vadd.f32 %v1753, %v1513
      %v1755 = vadd.f32 %v1754, %v1518
      %v1756 = vadd.f32 %v1755, %v1521
      %v1757 = vadd.f32 %v1756, %v1526
      %v1758 = vadd.f32 %v1757, %v1529
      %v1759 = vadd.f32 %v1758, %v1534
      %v1760 = vadd.f32 %v1759, %v1537
      %v1761 = vadd.f32 %v1760, %v1542
      %v1762 = vadd.f32 %v1761, %v1545
      %v1763 = vadd.f32 %v1762, %v1550
      %v1764 = vadd.f32 %v1763, %v1553
      %v1765 = vadd.f32 %v1764, %v1558
      %v1766 = vadd.f32 %v1765, %v1561
      %v1767 = vadd.f32 %v1766, %v1566
      %v1768 = vadd.f32 %v1767, %v1569
      %v1769 = vadd.f32 %v1768, %v1574
      %v1770 = vadd.f32 %v1769, %v1577
      %v1771 = vrot.slane %v1770, 4
      %v1772 = vadd.f32 %v1770, %v1771
      %v1773 = vrot.slane %v1772, 2
      %v1774 = vadd.f32 %v1772, %v1773
      %v1775 = vrot.slane %v1774, 1
      %v1776 = vadd.f32 %v1774, %v1775
      %v1777 = vmul.f32 %v1454, %v1454
      %v1778 = vmul.f32 %v1457, %v1457
      %v1779 = vmul.f32 %v1462, %v1462
      %v1780 = vmul.f32 %v1465, %v1465
      %v1781 = vmul.f32 %v1470, %v1470
      %v1782 = vmul.f32 %v1473, %v1473
      %v1783 = vmul.f32 %v1478, %v1478
      %v1784 = vmul.f32 %v1481, %v1481
      %v1785 = vmul.f32 %v1486, %v1486
      %v1786 = vmul.f32 %v1489, %v1489
      %v1787 = vmul.f32 %v1494, %v1494
      %v1788 = vmul.f32 %v1497, %v1497
      %v1789 = vmul.f32 %v1502, %v1502
      %v1790 = vmul.f32 %v1505, %v1505
      %v1791 = vmul.f32 %v1510, %v1510
      %v1792 = vmul.f32 %v1513, %v1513
      %v1793 = vmul.f32 %v1518, %v1518
      %v1794 = vmul.f32 %v1521, %v1521
      %v1795 = vmul.f32 %v1526, %v1526
      %v1796 = vmul.f32 %v1529, %v1529
      %v1797 = vmul.f32 %v1534, %v1534
      %v1798 = vmul.f32 %v1537, %v1537
      %v1799 = vmul.f32 %v1542, %v1542
      %v1800 = vmul.f32 %v1545, %v1545
      %v1801 = vmul.f32 %v1550, %v1550
      %v1802 = vmul.f32 %v1553, %v1553
      %v1803 = vmul.f32 %v1558, %v1558
      %v1804 = vmul.f32 %v1561, %v1561
      %v1805 = vmul.f32 %v1566, %v1566
      %v1806 = vmul.f32 %v1569, %v1569
      %v1807 = vmul.f32 %v1574, %v1574
      %v1808 = vmul.f32 %v1577, %v1577
      %v1809 = vadd.f32 %v1777, %v1778
      %v1810 = vadd.f32 %v1809, %v1779
      %v1811 = vadd.f32 %v1810, %v1780
      %v1812 = vadd.f32 %v1811, %v1781
      %v1813 = vadd.f32 %v1812, %v1782
      %v1814 = vadd.f32 %v1813, %v1783
      %v1815 = vadd.f32 %v1814, %v1784
      %v1816 = vadd.f32 %v1815, %v1785
      %v1817 = vadd.f32 %v1816, %v1786
      %v1818 = vadd.f32 %v1817, %v1787
      %v1819 = vadd.f32 %v1818, %v1788
      %v1820 = vadd.f32 %v1819, %v1789
      %v1821 = vadd.f32 %v1820, %v1790
      %v1822 = vadd.f32 %v1821, %v1791
      %v1823 = vadd.f32 %v1822, %v1792
      %v1824 = vadd.f32 %v1823, %v1793
      %v1825 = vadd.f32 %v1824, %v1794
      %v1826 = vadd.f32 %v1825, %v1795
      %v1827 = vadd.f32 %v1826, %v1796
      %v1828 = vadd.f32 %v1827, %v1797
      %v1829 = vadd.f32 %v1828, %v1798
      %v1830 = vadd.f32 %v1829, %v1799
      %v1831 = vadd.f32 %v1830, %v1800
      %v1832 = vadd.f32 %v1831, %v1801
      %v1833 = vadd.f32 %v1832, %v1802
      %v1834 = vadd.f32 %v1833, %v1803
      %v1835 = vadd.f32 %v1834, %v1804
      %v1836 = vadd.f32 %v1835, %v1805
      %v1837 = vadd.f32 %v1836, %v1806
      %v1838 = vadd.f32 %v1837, %v1807
      %v1839 = vadd.f32 %v1838, %v1808
      %v1840 = vrot.slane %v1839, 4
      %v1841 = vadd.f32 %v1839, %v1840
      %v1842 = vrot.slane %v1841, 2
      %v1843 = vadd.f32 %v1841, %v1842
      %v1844 = vrot.slane %v1843, 1
      %v1845 = vadd.f32 %v1843, %v1844
      %1846 = vst [vmem:[%s335] sm:$0x1] %v1776
      %1847 = vst [vmem:[%s335 + $0x1] sm:$0x1] %v1845
      %s1848 = sadd.s32 %s21, %s22
      %s1849 = smul.u32 32, %s1848
      %p1850 = scmp.lt.s32.totalorder %s1849, 63
      %s1851 = scalar_select %p1850, %s1849, 63
      %p1852 = scmp.lt.s32.totalorder %s23, 0
      %s1853 = scalar_select %p1852, %s23, 0
      %s1854 = sadd.s32 %s1853, %s1851
      %s1855 = smul.addr %s1854, 4
      %s1856 = scalar_lea.vmem %s3, %s1855
      %s1857 = sadd.s32 %s21, %s22
      %p1858 = scmp.lt.s32.totalorder %s1857, 1
      %s1859 = scalar_select %p1858, %s1857, 1
      %p1860 = scmp.lt.s32.totalorder %s23, 0
      %s1861 = scalar_select %p1860, %s23, 0
      %s1862 = sadd.s32 %s1861, %s1859
      %s1863 = smul.addr %s1862, 2
      %s1864 = scalar_lea.vmem %s4, %s1863
      // Predicated region
      $region33: #{conv_bn_relu.2} parent=31 // pred_check
        %p1865 = pneg %p141
      $region34: #{conv_bn_relu.2} parent=31 // pred_check_branch
        %1867 = sbr.rel (%p1865) target = $region36
      $region35: #{conv_bn_relu.2} parent=31 // pred_region
        %s1868 = sadd.s32 %s21, %s22
        %s1869 = smul.u32 32, %s1868
      $region36: #{conv_bn_relu.2} parent=31 // pred_fallthru
        _
      // Predicated region
      $region37: #{conv_bn_relu.2} parent=31 // pred_check
        %p1870 = pneg %p171
      $region38: #{conv_bn_relu.2} parent=31 // pred_check_branch
        %1872 = sbr.rel (%p1870) target = $region40
      $region39: #{conv_bn_relu.2} parent=31 // pred_region
        %s1873 = sadd.s32 %s21, %s22
      $region40: #{conv_bn_relu.2} parent=31 // pred_fallthru
        _
    $region32: #{conv_bn_relu.2} parent=5 // pred_fallthru
      _
    %p1874 = scmp.le.s32.totalorder 2, %s11
    // Predicated region
    $region41: #{conv_bn_relu.2} parent=5 // pred_check
      %p1875 = pneg %p1874
    $region42: #{conv_bn_relu.2} parent=5 // pred_check_branch
      %1877 = sbr.rel (%p1875) target = $region44
    $region43: #{conv_bn_relu.2} parent=5 // pred_region
      %s1878 = ssub.s32 %s11, 2
      // Predicated region
      $region45: #{conv_bn_relu.2} parent=43 // pred_check
        %p1879 = pneg %p147
      $region46: #{conv_bn_relu.2} parent=43 // pred_check_branch
        %1881 = sbr.rel (%p1879) target = $region48
      $region47: #{conv_bn_relu.2} parent=43 // pred_region
        %s1882 = sadd.s32 %s24, %s25
        %s1883 = smul.u32 32, %s1882
        %p1884 = scmp.lt.s32.totalorder %s1883, 63
        %s1885 = scalar_select %p1884, %s1883, 63
        %p1886 = scmp.lt.s32.totalorder %s26, 0
        %s1887 = scalar_select %p1886, %s26, 0
        %s1888 = sadd.s32 %s1887, %s1885
        %s1889 = smul.addr %s1888, 4
        %s1890 = scalar_lea.vmem %s3, %s1889
      $region48: #{conv_bn_relu.2} parent=43 // pred_fallthru
        _
      // Predicated region
      $region49: #{conv_bn_relu.2} parent=43 // pred_check
        %p1891 = pneg %p177
      $region50: #{conv_bn_relu.2} parent=43 // pred_check_branch
        %1893 = sbr.rel (%p1891) target = $region52
      $region51: #{conv_bn_relu.2} parent=43 // pred_region
        %s1894 = sadd.s32 %s24, %s25
        %p1895 = scmp.lt.s32.totalorder %s1894, 1
        %s1896 = scalar_select %p1895, %s1894, 1
        %p1897 = scmp.lt.s32.totalorder %s26, 0
        %s1898 = scalar_select %p1897, %s26, 0
        %s1899 = sadd.s32 %s1898, %s1896
        %s1900 = smul.addr %s1899, 2
        %s1901 = scalar_lea.vmem %s4, %s1900
      $region52: #{conv_bn_relu.2} parent=43 // pred_fallthru
        _
    $region44: #{conv_bn_relu.2} parent=5 // pred_fallthru
      _
  $region6: #{conv_bn_relu.2} parent=0 // loop_footer
    %s15 = sadd.s32 1, %s11
  $region7: #{conv_bn_relu.2} parent=0 // loop_footer_branch
    %10 = sbr.rel target = $region3
  $region8: #{conv_bn_relu.2} parent=0 // loop_exit
    _

</llo_original>
